<compile_context>
chip_gen: v7x
topology: tpu7x:2x2x1
jax: 0.10.0
libtpu: 0.0.40
codegen_flags: <defaults>
</compile_context>

<pallas_src>
from functools import partial

import jax
import jax.numpy as jnp
from jax.experimental import pallas as pl
from jax.experimental.pallas import tpu as pltpu

_MASK_VALUE = -1e30              # finite mask constant; scores kept in f32


def _vmem_limit_bytes():
  """Scoped VMEM limit with headroom below physical (v7x 64 MiB, v5e/v6e 128 MiB)."""
  cap = 64 * 1024 * 1024
  try:
    cap = int(pltpu.get_tpu_info().vmem_capacity_bytes)
  except Exception:
    pass
  if cap <= 0:
    cap = 64 * 1024 * 1024
  return int(max(32 * 1024 * 1024,
                 min(cap - 16 * 1024 * 1024, 110 * 1024 * 1024)))


_VMEM_LIMIT = _vmem_limit_bytes()


def _pick_tile(n, cap):
  for t in (1024, 512, 256, 128, 64, 32, 16, 8):
    if t <= cap and n % t == 0:
      return t
  return n


def _attn_kv_tile(s, tq):
  # Prefer a kv tile 2-4x the q tile to amortize per-grid-step overhead.
  for t in (512, 256, 128, 64, 32, 16, 8):
    if t >= tq and s % t == 0:
      return t
  return tq


def _heads_per_step(nh, hd):
  # Largest head group dividing nh with group*hd <= 512 (o_proj K chunk).
  target = max(1, 512 // hd)
  kh = 1
  for c in range(1, nh + 1):
    if nh % c == 0 and c <= target:
      kh = c
  return kh


# -----------------------------------------------------------------------------
# Kernel 1: QKV projection (K-tiled, f32 accumulator) + QK-RMSNorm + RoPE.
# Writes q/k/v head-major (B, heads, S, hd) bf16; softmax scale folded into q.
# -----------------------------------------------------------------------------
def qkv_norm_rope_kernel(x_ref, w_ref, qg_ref, kg_ref, cos_ref, sin_ref,
                         q_out, k_out, v_out, acc_ref,
                         *, q_size, kv_size, num_heads, num_kv_heads,
                         head_dim, eps, scale):
  kk = pl.program_id(2)

  @pl.when(kk == 0)
  def _():
    acc_ref[...] = jnp.zeros_like(acc_ref)

  acc_ref[...] += jnp.dot(x_ref[0].astype(jnp.bfloat16), w_ref[...],
                          preferred_element_type=jnp.float32)

  @pl.when(kk == pl.num_programs(2) - 1)
  def _():
    qkv = acc_ref[...]                                   # (tm, q+2kv) f32
    tm = qkv.shape[0]
    hd2 = head_dim // 2

    def rms(v, g):                                       # f32 statistics
      var = jnp.mean(v * v, axis=-1, keepdims=True)
      return v * jax.lax.rsqrt(var + eps) * g

    q = rms(qkv[:, :q_size], qg_ref[...])
    k = rms(qkv[:, q_size:q_size + kv_size], kg_ref[...])
    v = qkv[:, q_size + kv_size:]

    cos = cos_ref[0][:, None, :]                         # (tm, 1, hd/2)
    sin = sin_ref[0][:, None, :]

    def rope(t, nh):                                     # neox rotate-half, f32
      t3 = t.reshape(tm, nh, head_dim)
      t1, t2 = t3[..., :hd2], t3[..., hd2:]
      r = jnp.concatenate([t1 * cos - t2 * sin, t2 * cos + t1 * sin], axis=-1)
      return r.reshape(tm, nh * head_dim)

    qr = (rope(q, num_heads) * scale).astype(q_out.dtype)
    kr = rope(k, num_kv_heads).astype(k_out.dtype)
    vv = v.astype(v_out.dtype)

    # Head-major stores: static lane-slice slabs (lane-dense for hd=128).
    for h in range(num_heads):
      q_out[0, h] = qr[:, h * head_dim:(h + 1) * head_dim]
    for h in range(num_kv_heads):
      k_out[0, h] = kr[:, h * head_dim:(h + 1) * head_dim]
      v_out[0, h] = vv[:, h * head_dim:(h + 1) * head_dim]


# -----------------------------------------------------------------------------
# Kernel 2: causal flash attention (GQA, online softmax), RoPE already applied.
#   grid = (B, num_kv_heads, n_q_tiles, n_kv_tiles); kv axis is the reduction.
#   * kv tiles past the diagonal: compute skipped AND DMA elided (clamped maps)
#   * causal mask applied only on tiles straddling the diagonal.
# -----------------------------------------------------------------------------
def flash_attn_kernel(q_ref, k_ref, v_ref, o_ref, m_sc, l_sc, acc_sc,
                      *, tq, tk, head_dim):
  qi = pl.program_id(2)
  ki = pl.program_id(3)
  g = q_ref.shape[1]                     # q heads per kv head (GQA group size)
  last_ki = ((qi + 1) * tq - 1) // tk    # last kv tile overlapping this q tile

  @pl.when(ki == 0)
  def _():
    m_sc[...] = jnp.full_like(m_sc, _MASK_VALUE)
    l_sc[...] = jnp.zeros_like(l_sc)
    acc_sc[...] = jnp.zeros_like(acc_sc)

  @pl.when(ki <= last_ki)
  def _():
    q2 = q_ref[0].reshape(g * tq, head_dim)              # rows ordered (g, t)
    k2 = k_ref[0, 0]                                     # (tk, hd) bf16
    v2 = v_ref[0, 0]                                     # (tk, hd) bf16

    # Contract on head_dim without materializing k.T (MXU-native layout).
    s = jax.lax.dot_general(q2, k2, (((1,), (1,)), ((), ())),
                            preferred_element_type=jnp.float32)

    def online_update(s_val):
      m_prev = m_sc[...]
      m_new = jnp.maximum(m_prev, jnp.max(s_val, axis=-1, keepdims=True))
      alpha = jnp.exp(m_prev - m_new)
      p = jnp.exp(s_val - m_new)
      l_sc[...] = alpha * l_sc[...] + jnp.sum(p, axis=-1, keepdims=True)
      acc_sc[...] = alpha * acc_sc[...] + jnp.dot(
          p.astype(jnp.bfloat16), v2, preferred_element_type=jnp.float32)
      m_sc[...] = m_new

    needs_mask = (ki + 1) * tk - 1 > qi * tq             # straddles diagonal?

    @pl.when(needs_mask)
    def _():
      rows = qi * tq + (
          jax.lax.broadcasted_iota(jnp.int32, (g * tq, tk), 0) % tq)
      cols = ki * tk + jax.lax.broadcasted_iota(jnp.int32, (g * tq, tk), 1)
      online_update(jnp.where(rows >= cols, s, _MASK_VALUE))

    @pl.when(jnp.logical_not(needs_mask))
    def _():
      online_update(s)

  @pl.when(ki == last_ki)
  def _():
    inv_l = pl.reciprocal(l_sc[...], approx=True)        # EUP, ~free
    o_ref[0] = (acc_sc[...] * inv_l).reshape(g, tq, head_dim).astype(o_ref.dtype)


# -----------------------------------------------------------------------------
# Kernel 3: o_proj (consumes head-major attention output; heads = K axis)
#           + post-attention RMSNorm + residual.
# -----------------------------------------------------------------------------
def o_proj_norm_residual_kernel(x_ref, w_ref, gamma_ref, res_ref, out_ref,
                                acc_ref, *, heads_per_step, head_dim, eps):
  kk = pl.program_id(2)

  @pl.when(kk == 0)
  def _():
    acc_ref[...] = jnp.zeros_like(acc_ref)

  for h in range(heads_per_step):                        # unrolled head group
    acc_ref[...] += jnp.dot(
        x_ref[0, h], w_ref[h * head_dim:(h + 1) * head_dim, :],
        preferred_element_type=jnp.float32)

  @pl.when(kk == pl.num_programs(2) - 1)
  def _():
    y = acc_ref[...]
    var = jnp.mean(y * y, axis=-1, keepdims=True)
    normed = y * jax.lax.rsqrt(var + eps) * gamma_ref[...]
    out_ref[0] = (res_ref[0].astype(jnp.float32) + normed).astype(out_ref.dtype)


# -----------------------------------------------------------------------------
# Kernel 4: gate_up projection, N-tiled (separate gate/up column tiles),
#           K-tiled accumulation + SiluAndMul.
# -----------------------------------------------------------------------------
def gate_up_silu_kernel(x_ref, wg_ref, wu_ref, out_ref, gate_acc, up_acc):
  kk = pl.program_id(2)

  @pl.when(kk == 0)
  def _():
    gate_acc[...] = jnp.zeros_like(gate_acc)
    up_acc[...] = jnp.zeros_like(up_acc)

  x = x_ref[...].astype(jnp.bfloat16)
  gate_acc[...] += jnp.dot(x, wg_ref[...], preferred_element_type=jnp.float32)
  up_acc[...] += jnp.dot(x, wu_ref[...], preferred_element_type=jnp.float32)

  @pl.when(kk == pl.num_programs(2) - 1)
  def _():
    gate = gate_acc[...]
    out_ref[...] = (gate * jax.nn.sigmoid(gate) * up_acc[...]).astype(out_ref.dtype)


# -----------------------------------------------------------------------------
# Kernel 5: down_proj (K-tiled) + post-feedforward RMSNorm + residual.
# -----------------------------------------------------------------------------
def down_norm_residual_kernel(x_ref, w_ref, gamma_ref, res_ref, out_ref,
                              acc_ref, *, eps):
  kk = pl.program_id(1)

  @pl.when(kk == 0)
  def _():
    acc_ref[...] = jnp.zeros_like(acc_ref)

  acc_ref[...] += jnp.dot(x_ref[...].astype(jnp.bfloat16), w_ref[...],
                          preferred_element_type=jnp.float32)

  @pl.when(kk == pl.num_programs(1) - 1)
  def _():
    y = acc_ref[...]
    var = jnp.mean(y * y, axis=-1, keepdims=True)
    normed = y * jax.lax.rsqrt(var + eps) * gamma_ref[...]
    out_ref[...] = (res_ref[...].astype(jnp.float32) + normed).astype(out_ref.dtype)


# -----------------------------------------------------------------------------
# Kernel 6: row-tiled RMSNorm (final model norm), flattened (B*S, H).
# -----------------------------------------------------------------------------
def rmsnorm_kernel(x_ref, g_ref, o_ref, *, eps):
  x = x_ref[...].astype(jnp.float32)
  var = jnp.mean(x * x, axis=-1, keepdims=True)
  o_ref[...] = (x * jax.lax.rsqrt(var + eps) * g_ref[...]).astype(o_ref.dtype)


# -----------------------------------------------------------------------------
# Wrappers
# -----------------------------------------------------------------------------
def _qkv_proj(hidden, cos, sin, p, cfg):
  B, S, H = hidden.shape
  NH, NKV, hd = cfg["num_heads"], cfg["num_kv_heads"], cfg["head_dim"]
  q_size, kv_size = NH * hd, NKV * hd
  eps = cfg["rms_norm_eps"]
  hd2 = hd // 2
  tm = _pick_tile(S, 256)
  tk = _pick_tile(H, 256)
  n_total = q_size + 2 * kv_size

  return pl.pallas_call(
      partial(qkv_norm_rope_kernel, q_size=q_size, kv_size=kv_size,
              num_heads=NH, num_kv_heads=NKV, head_dim=hd, eps=eps,
              scale=hd ** -0.5),
      grid=(B, S // tm, H // tk),
      in_specs=[
          pl.BlockSpec((1, tm, tk), lambda b, m, k: (b, m, k)),
          pl.BlockSpec((tk, n_total), lambda b, m, k: (k, 0)),
          pl.BlockSpec((1, q_size), lambda b, m, k: (0, 0)),
          pl.BlockSpec((1, kv_size), lambda b, m, k: (0, 0)),
          pl.BlockSpec((1, tm, hd2), lambda b, m, k: (b, m, 0)),
          pl.BlockSpec((1, tm, hd2), lambda b, m, k: (b, m, 0)),
      ],
      out_specs=(
          pl.BlockSpec((1, NH, tm, hd), lambda b, m, k: (b, 0, m, 0)),
          pl.BlockSpec((1, NKV, tm, hd), lambda b, m, k: (b, 0, m, 0)),
          pl.BlockSpec((1, NKV, tm, hd), lambda b, m, k: (b, 0, m, 0)),
      ),
      out_shape=(
          jax.ShapeDtypeStruct((B, NH, S, hd), jnp.bfloat16),
          jax.ShapeDtypeStruct((B, NKV, S, hd), jnp.bfloat16),
          jax.ShapeDtypeStruct((B, NKV, S, hd), jnp.bfloat16),
      ),
      scratch_shapes=[pltpu.VMEM((tm, n_total), jnp.float32)],
      compiler_params=pltpu.CompilerParams(
          dimension_semantics=("parallel", "parallel", "arbitrary"),
          vmem_limit_bytes=_VMEM_LIMIT),
  )(hidden, p["w_qkv"], p["q_norm"], p["k_norm"], cos, sin)


def _flash_attention(q4, k4, v4, cfg):
  B, NH, S, hd = q4.shape
  NKV = k4.shape[1]
  G = NH // NKV
  tq = _pick_tile(S, 256)
  tk = _attn_kv_tile(S, tq)
  nq, nk = S // tq, S // tk

  def kv_idx(b, n, qi, ki):
    # Clamp to the last causally-relevant kv tile so skipped steps re-present
    # the resident block and Pallas elides the DMA.
    last = ((qi + 1) * tq - 1) // tk
    return (b, n, jnp.minimum(ki, last), 0)

  return pl.pallas_call(
      partial(flash_attn_kernel, tq=tq, tk=tk, head_dim=hd),
      grid=(B, NKV, nq, nk),
      in_specs=[
          pl.BlockSpec((1, G, tq, hd), lambda b, n, qi, ki: (b, n, qi, 0)),
          pl.BlockSpec((1, 1, tk, hd), kv_idx),
          pl.BlockSpec((1, 1, tk, hd), kv_idx),
      ],
      out_specs=pl.BlockSpec((1, G, tq, hd), lambda b, n, qi, ki: (b, n, qi, 0)),
      out_shape=jax.ShapeDtypeStruct((B, NH, S, hd), jnp.bfloat16),
      scratch_shapes=[
          pltpu.VMEM((G * tq, 1), jnp.float32),    # running max
          pltpu.VMEM((G * tq, 1), jnp.float32),    # running denom
          pltpu.VMEM((G * tq, hd), jnp.float32),   # output accumulator
      ],
      compiler_params=pltpu.CompilerParams(
          dimension_semantics=("parallel", "parallel", "parallel", "arbitrary"),
          vmem_limit_bytes=_VMEM_LIMIT),
  )(q4, k4, v4)


def _o_proj_norm_residual(attn4, w_o, gamma, residual, cfg):
  B, NH, S, hd = attn4.shape
  H = w_o.shape[1]
  eps = cfg["rms_norm_eps"]
  tm = _pick_tile(S, 256)
  kh = _heads_per_step(NH, hd)

  return pl.pallas_call(
      partial(o_proj_norm_residual_kernel, heads_per_step=kh, head_dim=hd,
              eps=eps),
      grid=(B, S // tm, NH // kh),
      in_specs=[
          pl.BlockSpec((1, kh, tm, hd), lambda b, m, k: (b, k, m, 0)),
          pl.BlockSpec((kh * hd, H), lambda b, m, k: (k, 0)),
          pl.BlockSpec((1, H), lambda b, m, k: (0, 0)),
          pl.BlockSpec((1, tm, H), lambda b, m, k: (b, m, 0)),
      ],
      out_specs=pl.BlockSpec((1, tm, H), lambda b, m, k: (b, m, 0)),
      out_shape=jax.ShapeDtypeStruct((B, S, H), jnp.float32),
      scratch_shapes=[pltpu.VMEM((tm, H), jnp.float32)],
      compiler_params=pltpu.CompilerParams(
          dimension_semantics=("parallel", "parallel", "arbitrary"),
          vmem_limit_bytes=_VMEM_LIMIT),
  )(attn4, w_o, gamma, residual)


def _gate_up_silu(h1, w_gate, w_up, cfg):
  B, S, H = h1.shape
  I = w_gate.shape[1]
  M = B * S
  x2 = h1.reshape(M, H)
  tm = _pick_tile(M, 512)
  tn = _pick_tile(I, 512)
  tk = _pick_tile(H, 512)

  return pl.pallas_call(
      gate_up_silu_kernel,
      grid=(M // tm, I // tn, H // tk),
      in_specs=[
          pl.BlockSpec((tm, tk), lambda m, n, k: (m, k)),
          pl.BlockSpec((tk, tn), lambda m, n, k: (k, n)),
          pl.BlockSpec((tk, tn), lambda m, n, k: (k, n)),
      ],
      out_specs=pl.BlockSpec((tm, tn), lambda m, n, k: (m, n)),
      out_shape=jax.ShapeDtypeStruct((M, I), jnp.bfloat16),
      scratch_shapes=[pltpu.VMEM((tm, tn), jnp.float32),
                      pltpu.VMEM((tm, tn), jnp.float32)],
      compiler_params=pltpu.CompilerParams(
          dimension_semantics=("parallel", "parallel", "arbitrary"),
          vmem_limit_bytes=_VMEM_LIMIT),
  )(x2, w_gate, w_up)


def _down_norm_residual(act, w_down, gamma, residual, cfg):
  M, I = act.shape
  H = w_down.shape[1]
  B, S, _ = residual.shape
  eps = cfg["rms_norm_eps"]
  tm = _pick_tile(M, 256)
  tk = _pick_tile(I, 512)

  out = pl.pallas_call(
      partial(down_norm_residual_kernel, eps=eps),
      grid=(M // tm, I // tk),
      in_specs=[
          pl.BlockSpec((tm, tk), lambda m, k: (m, k)),
          pl.BlockSpec((tk, H), lambda m, k: (k, 0)),
          pl.BlockSpec((1, H), lambda m, k: (0, 0)),
          pl.BlockSpec((tm, H), lambda m, k: (m, 0)),
      ],
      out_specs=pl.BlockSpec((tm, H), lambda m, k: (m, 0)),
      out_shape=jax.ShapeDtypeStruct((M, H), jnp.float32),
      scratch_shapes=[pltpu.VMEM((tm, H), jnp.float32)],
      compiler_params=pltpu.CompilerParams(
          dimension_semantics=("parallel", "arbitrary"),
          vmem_limit_bytes=_VMEM_LIMIT),
  )(act, w_down, gamma, residual.reshape(M, H))
  return out.reshape(B, S, H)


def run_decoder_layer(hidden, cos, sin, p, cfg):
  q4, k4, v4 = _qkv_proj(hidden, cos, sin, p, cfg)
  attn4 = _flash_attention(q4, k4, v4, cfg)
  h1 = _o_proj_norm_residual(attn4, p["w_o"], p["post_attn_ln"], hidden, cfg)
  act = _gate_up_silu(h1, p["w_gate"], p["w_up"], cfg)
  return _down_norm_residual(act, p["w_down"], p["post_ff_ln"], h1, cfg)


def run_final_norm(hidden, gamma, eps):
  B, S, H = hidden.shape
  M = B * S
  tm = _pick_tile(M, 512)
  out = pl.pallas_call(
      partial(rmsnorm_kernel, eps=eps),
      grid=(M // tm,),
      in_specs=[pl.BlockSpec((tm, H), lambda m: (m, 0)),
                pl.BlockSpec((1, H), lambda m: (0, 0))],
      out_specs=pl.BlockSpec((tm, H), lambda m: (m, 0)),
      out_shape=jax.ShapeDtypeStruct((M, H), jnp.float32),
      compiler_params=pltpu.CompilerParams(
          dimension_semantics=("parallel",),
          vmem_limit_bytes=_VMEM_LIMIT),
  )(hidden.reshape(M, H), gamma)
  return out.reshape(B, S, H)


def olmo2_model_forward(input_ids, positions, params, cfg):
  # Token embedding (gather) — plain-JAX glue.
  hidden = jnp.take(params["embed_tokens"], input_ids, axis=0)     # (B,S,H) f32

  # Rotary cos/sin tables from positions — plain-JAX glue (trig tables).
  hd = cfg["head_dim"]
  inv_freq = 1.0 / (cfg["rope_theta"] **
                    (jnp.arange(0, hd, 2, dtype=jnp.float32) / hd))
  freqs = positions.astype(jnp.float32)[..., None] * inv_freq      # (B,S,hd/2)
  cos = jnp.cos(freqs)
  sin = jnp.sin(freqs)

  for layer_params in params["layers"]:
    hidden = run_decoder_layer(hidden, cos, sin, layer_params, cfg)

  return run_final_norm(hidden, params["final_norm"], cfg["rms_norm_eps"])


# -----------------------------------------------------------------------------
# Pure-JAX reference (f32) for correctness checking.
# -----------------------------------------------------------------------------
def _ref_rmsnorm(x, gamma, eps):
  var = jnp.mean(x * x, axis=-1, keepdims=True)
  return x * jax.lax.rsqrt(var + eps) * gamma


def ref_forward(input_ids, positions, params, cfg):
  hd = cfg["head_dim"]
  NH = cfg["num_heads"]
  NKV = cfg["num_kv_heads"]
  G = NH // NKV
  eps = cfg["rms_norm_eps"]
  q_size, kv_size = NH * hd, NKV * hd
  B, S = input_ids.shape

  hidden = jnp.take(params["embed_tokens"], input_ids, axis=0).astype(jnp.float32)
  inv_freq = 1.0 / (cfg["rope_theta"] **
                    (jnp.arange(0, hd, 2, dtype=jnp.float32) / hd))
  freqs = positions.astype(jnp.float32)[..., None] * inv_freq
  cos = jnp.cos(freqs)[:, :, None, :]
  sin = jnp.sin(freqs)[:, :, None, :]

  def rope(t, nh):
    t4 = t.reshape(B, S, nh, hd)
    t1, t2 = t4[..., :hd // 2], t4[..., hd // 2:]
    return jnp.concatenate([t1 * cos - t2 * sin, t2 * cos + t1 * sin], axis=-1)

  for lp in params["layers"]:
    qkv = hidden @ lp["w_qkv"].astype(jnp.float32)
    q = _ref_rmsnorm(qkv[..., :q_size], lp["q_norm"][0], eps)
    k = _ref_rmsnorm(qkv[..., q_size:q_size + kv_size], lp["k_norm"][0], eps)
    v = qkv[..., q_size + kv_size:]
    q4 = rope(q, NH)
    k4 = jnp.repeat(rope(k, NKV), G, axis=2)
    v4 = jnp.repeat(v.reshape(B, S, NKV, hd), G, axis=2)
    scores = jnp.einsum("bqhd,bkhd->bhqk", q4, k4) * hd ** -0.5
    mask = jnp.arange(S)[:, None] >= jnp.arange(S)[None, :]
    scores = jnp.where(mask, scores, _MASK_VALUE)
    p = jax.nn.softmax(scores, axis=-1)
    attn = jnp.einsum("bhqk,bkhd->bqhd", p, v4).reshape(B, S, q_size)
    h1 = hidden + _ref_rmsnorm(attn @ lp["w_o"].astype(jnp.float32),
                               lp["post_attn_ln"][0], eps)
    gate = h1 @ lp["w_gate"].astype(jnp.float32)
    up = h1 @ lp["w_up"].astype(jnp.float32)
    act = gate * jax.nn.sigmoid(gate) * up
    hidden = h1 + _ref_rmsnorm(act @ lp["w_down"].astype(jnp.float32),
                               lp["post_ff_ln"][0], eps)
  return _ref_rmsnorm(hidden, params["final_norm"][0], eps)


# -----------------------------------------------------------------------------
# Deterministic parameter init (synthetic, matching Olmo2 module shapes).
# Weights stored bf16 (MXU dtype); norm gains + embedding in f32.
# -----------------------------------------------------------------------------
def init_params(key, cfg):
  H = cfg["hidden_size"]
  I = cfg["intermediate_size"]
  hd = cfg["head_dim"]
  q_size = cfg["num_heads"] * hd
  kv_size = cfg["num_kv_heads"] * hd

  def dense(k, shape):
    return (0.02 * jax.random.normal(k, shape, dtype=jnp.float32)).astype(jnp.bfloat16)

  keys = jax.random.split(key, 1 + 5 * cfg["num_layers"])
  params = {
      "embed_tokens": (0.02 * jax.random.normal(keys[0], (cfg["vocab_size"], H),
                                                dtype=jnp.float32)),
      "final_norm": jnp.ones((1, H), jnp.float32),
      "layers": [],
  }
  for l in range(cfg["num_layers"]):
    k0, k1, k2, k3, k4 = keys[1 + 5 * l: 1 + 5 * (l + 1)]
    params["layers"].append({
        "w_qkv": dense(k0, (H, q_size + 2 * kv_size)),
        "q_norm": jnp.ones((1, q_size), jnp.float32),
        "k_norm": jnp.ones((1, kv_size), jnp.float32),
        "w_o": dense(k1, (q_size, H)),
        "post_attn_ln": jnp.ones((1, H), jnp.float32),
        "w_gate": dense(k2, (H, I)),
        "w_up": dense(k3, (H, I)),
        "w_down": dense(k4, (I, H)),
        "post_ff_ln": jnp.ones((1, H), jnp.float32),
    })
  return params


# -----------------------------------------------------------------------------
if __name__ == "__main__":
  cfg = dict(
      vocab_size=128,
      hidden_size=32,
      num_heads=4,
      num_kv_heads=2,
      head_dim=8,              # hidden_size // num_heads
      intermediate_size=64,
      num_layers=2,
      rms_norm_eps=1e-6,
      rope_theta=10000.0,
  )
  B, S = 2, 8

  key = jax.random.PRNGKey(0)
  k_param, k_ids = jax.random.split(key)
  params = init_params(k_param, cfg)

  input_ids = jax.random.randint(k_ids, (B, S), 0, cfg["vocab_size"],
                                 dtype=jnp.int32)
  positions = jnp.broadcast_to(jnp.arange(S, dtype=jnp.int32), (B, S))

  out = olmo2_model_forward(input_ids, positions, params, cfg)
  out = jax.block_until_ready(out)
  assert out.shape == (B, S, cfg["hidden_size"])
  assert bool(jnp.all(jnp.isfinite(out)))

  ref = ref_forward(input_ids, positions, params, cfg)
  assert bool(jnp.allclose(out, ref, atol=5e-2, rtol=5e-2)), (
      "mismatch vs f32 reference: max abs err = "
      f"{float(jnp.max(jnp.abs(out - ref)))}")

  print("KERNEL_OK")
</pallas_src>

<mosaic_0001>
module attributes {stable_mosaic.version = 11 : i64} {
  func.func @qkv_norm_rope_kernel(%arg0: i32, %arg1: i32, %arg2: i32, %arg3: memref<1x8x32xf32, #tpu.memory_space<vmem>>, %arg4: memref<32x64xbf16, #tpu.memory_space<vmem>>, %arg5: memref<1x32xf32, #tpu.memory_space<vmem>>, %arg6: memref<1x16xf32, #tpu.memory_space<vmem>>, %arg7: memref<1x8x4xf32, #tpu.memory_space<vmem>>, %arg8: memref<1x8x4xf32, #tpu.memory_space<vmem>>, %arg9: memref<1x4x8x8xbf16, #tpu.memory_space<vmem>>, %arg10: memref<1x2x8x8xbf16, #tpu.memory_space<vmem>>, %arg11: memref<1x2x8x8xbf16, #tpu.memory_space<vmem>>, %arg12: memref<8x64xf32, #tpu.memory_space<vmem>>) attributes {dimension_semantics = [#tpu.dimension_semantics<parallel>, #tpu.dimension_semantics<parallel>, #tpu.dimension_semantics<arbitrary>], iteration_bounds = array<i64: 2, 1, 1>, scalar_prefetch = 0 : i64, scratch_operands = 1 : i64, tpu.core_type = #tpu.core_type<tc>, window_params = [{transform_indices = @transform_0, window_bounds = array<i64: 1, 8, 32>}, {transform_indices = @transform_1, window_bounds = array<i64: 32, 64>}, {pipeline_mode = #tpu.pipeline_mode<synchronous>, transform_indices = @transform_2, window_bounds = array<i64: 1, 32>}, {pipeline_mode = #tpu.pipeline_mode<synchronous>, transform_indices = @transform_3, window_bounds = array<i64: 1, 16>}, {transform_indices = @transform_4, window_bounds = array<i64: 1, 8, 4>}, {transform_indices = @transform_5, window_bounds = array<i64: 1, 8, 4>}, {transform_indices = @transform_6, window_bounds = array<i64: 1, 4, 8, 8>}, {transform_indices = @transform_7, window_bounds = array<i64: 1, 2, 8, 8>}, {transform_indices = @transform_8, window_bounds = array<i64: 1, 2, 8, 8>}]} {
    %c0_i32 = arith.constant 0 : i32
    %0 = arith.cmpi eq, %arg2, %c0_i32 : i32
    %1 = arith.extui %0 : i1 to i32
    %c0_i32_0 = arith.constant 0 : i32
    %2 = arith.cmpi ne, %1, %c0_i32_0 : i32
    scf.if %2 {
      %cst_11 = arith.constant 0.000000e+00 : f32
      %14 = vector.broadcast %cst_11 : f32 to vector<8x64xf32>
      %c0_12 = arith.constant 0 : index
      %c0_13 = arith.constant 0 : index
      %15 = vector.load %arg12[%c0_12, %c0_13] : memref<8x64xf32, #tpu.memory_space<vmem>>, vector<8x64xf32>
      tpu.vector_store %arg12[%c0_12, %c0_13], %14 {strides = array<i32>} : memref<8x64xf32, #tpu.memory_space<vmem>>, vector<8x64xf32>,
    } else {
    }
    %c0 = arith.constant 0 : index
    %c0_1 = arith.constant 0 : index
    %3 = vector.load %arg12[%c0, %c0_1] : memref<8x64xf32, #tpu.memory_space<vmem>>, vector<8x64xf32>
    %c0_2 = arith.constant 0 : index
    %c0_3 = arith.constant 0 : index
    %c0_4 = arith.constant 0 : index
    %4 = vector.load %arg3[%c0_2, %c0_3, %c0_4] : memref<1x8x32xf32, #tpu.memory_space<vmem>>, vector<1x8x32xf32>
    %5 = vector.shape_cast %4 : vector<1x8x32xf32> to vector<8x32xf32>
    %6 = arith.truncf %5 : vector<8x32xf32> to vector<8x32xbf16>
    %c0_5 = arith.constant 0 : index
    %c0_6 = arith.constant 0 : index
    %7 = vector.load %arg4[%c0_5, %c0_6] : memref<32x64xbf16, #tpu.memory_space<vmem>>, vector<32x64xbf16>
    %cst = arith.constant dense<0.000000e+00> : vector<8x64xf32>
    %8 = tpu.matmul %6, %7, %cst {dimension_numbers = #tpu.dot_dimension_numbers<[1], [0], [0], [1], [0, 0, 1, 1], [], []>} : vector<8x32xbf16>, vector<32x64xbf16>, vector<8x64xf32> -> vector<8x64xf32>
    %9 = arith.addf %3, %8 : vector<8x64xf32>
    %c0_7 = arith.constant 0 : index
    %c0_8 = arith.constant 0 : index
    %10 = vector.load %arg12[%c0_7, %c0_8] : memref<8x64xf32, #tpu.memory_space<vmem>>, vector<8x64xf32>
    tpu.vector_store %arg12[%c0_7, %c0_8], %9 {strides = array<i32>} : memref<8x64xf32, #tpu.memory_space<vmem>>, vector<8x64xf32>,
    %c0_i32_9 = arith.constant 0 : i32
    %11 = arith.cmpi eq, %arg2, %c0_i32_9 : i32
    %12 = arith.extui %11 : i1 to i32
    %c0_i32_10 = arith.constant 0 : i32
    %13 = arith.cmpi ne, %12, %c0_i32_10 : i32
    scf.if %13 {
      %c0_11 = arith.constant 0 : index
      %c0_12 = arith.constant 0 : index
      %14 = vector.load %arg12[%c0_11, %c0_12] : memref<8x64xf32, #tpu.memory_space<vmem>>, vector<8x64xf32>
      %15 = vector.extract_strided_slice %14 {offsets = [0, 0], sizes = [8, 32], strides = [1, 1]} : vector<8x64xf32> to vector<8x32xf32>
      %c0_13 = arith.constant 0 : index
      %c0_14 = arith.constant 0 : index
      %16 = vector.load %arg5[%c0_13, %c0_14] : memref<1x32xf32, #tpu.memory_space<vmem>>, vector<1x32xf32>
      %17 = arith.mulf %15, %15 : vector<8x32xf32>
      %cst_15 = arith.constant dense<0.000000e+00> : vector<8xf32>
      %18 = vector.multi_reduction <add>, %17, %cst_15 [1] : vector<8x32xf32> to vector<8xf32>
      %19 = vector.shape_cast %18 : vector<8xf32> to vector<8x1xf32>
      %cst_16 = arith.constant 3.200000e+01 : f32
      %20 = vector.broadcast %cst_16 : f32 to vector<8x1xf32>
      %21 = arith.divf %19, %20 : vector<8x1xf32>
      %cst_17 = arith.constant 9.99999997E-7 : f32
      %22 = vector.broadcast %cst_17 : f32 to vector<8x1xf32>
      %23 = arith.addf %21, %22 : vector<8x1xf32>
      %24 = math.rsqrt %23 : vector<8x1xf32>
      %25 = vector.broadcast %24 : vector<8x1xf32> to vector<8x32xf32>
      %26 = arith.mulf %15, %25 : vector<8x32xf32>
      %27 = vector.broadcast %16 : vector<1x32xf32> to vector<8x32xf32>
      %28 = arith.mulf %26, %27 : vector<8x32xf32>
      %29 = vector.extract_strided_slice %14 {offsets = [0, 32], sizes = [8, 16], strides = [1, 1]} : vector<8x64xf32> to vector<8x16xf32>
      %c0_18 = arith.constant 0 : index
      %c0_19 = arith.constant 0 : index
      %30 = vector.load %arg6[%c0_18, %c0_19] : memref<1x16xf32, #tpu.memory_space<vmem>>, vector<1x16xf32>
      %31 = arith.mulf %29, %29 : vector<8x16xf32>
      %cst_20 = arith.constant dense<0.000000e+00> : vector<8xf32>
      %32 = vector.multi_reduction <add>, %31, %cst_20 [1] : vector<8x16xf32> to vector<8xf32>
      %33 = vector.shape_cast %32 : vector<8xf32> to vector<8x1xf32>
      %cst_21 = arith.constant 1.600000e+01 : f32
      %34 = vector.broadcast %cst_21 : f32 to vector<8x1xf32>
      %35 = arith.divf %33, %34 : vector<8x1xf32>
      %cst_22 = arith.constant 9.99999997E-7 : f32
      %36 = vector.broadcast %cst_22 : f32 to vector<8x1xf32>
      %37 = arith.addf %35, %36 : vector<8x1xf32>
      %38 = math.rsqrt %37 : vector<8x1xf32>
      %39 = vector.broadcast %38 : vector<8x1xf32> to vector<8x16xf32>
      %40 = arith.mulf %29, %39 : vector<8x16xf32>
      %41 = vector.broadcast %30 : vector<1x16xf32> to vector<8x16xf32>
      %42 = arith.mulf %40, %41 : vector<8x16xf32>
      %43 = vector.extract_strided_slice %14 {offsets = [0, 48], sizes = [8, 16], strides = [1, 1]} : vector<8x64xf32> to vector<8x16xf32>
      %c0_23 = arith.constant 0 : index
      %c0_24 = arith.constant 0 : index
      %c0_25 = arith.constant 0 : index
      %44 = vector.load %arg7[%c0_23, %c0_24, %c0_25] : memref<1x8x4xf32, #tpu.memory_space<vmem>>, vector<1x8x4xf32>
      %45 = vector.shape_cast %44 : vector<1x8x4xf32> to vector<8x4xf32>
      %46 = vector.shape_cast %45 : vector<8x4xf32> to vector<8x1x4xf32>
      %c0_26 = arith.constant 0 : index
      %c0_27 = arith.constant 0 : index
      %c0_28 = arith.constant 0 : index
      %47 = vector.load %arg8[%c0_26, %c0_27, %c0_28] : memref<1x8x4xf32, #tpu.memory_space<vmem>>, vector<1x8x4xf32>
      %48 = vector.shape_cast %47 : vector<1x8x4xf32> to vector<8x4xf32>
      %49 = vector.shape_cast %48 : vector<8x4xf32> to vector<8x1x4xf32>
      %50 = vector.shape_cast %28 : vector<8x32xf32> to vector<8x4x8xf32>
      %51 = vector.extract_strided_slice %50 {offsets = [0, 0, 0], sizes = [8, 4, 4], strides = [1, 1, 1]} : vector<8x4x8xf32> to vector<8x4x4xf32>
      %52 = vector.extract_strided_slice %50 {offsets = [0, 0, 4], sizes = [8, 4, 4], strides = [1, 1, 1]} : vector<8x4x8xf32> to vector<8x4x4xf32>
      %53 = vector.broadcast %46 : vector<8x1x4xf32> to vector<8x4x4xf32>
      %54 = arith.mulf %51, %53 : vector<8x4x4xf32>
      %55 = vector.broadcast %49 : vector<8x1x4xf32> to vector<8x4x4xf32>
      %56 = arith.mulf %52, %55 : vector<8x4x4xf32>
      %57 = arith.subf %54, %56 : vector<8x4x4xf32>
      %58 = vector.broadcast %46 : vector<8x1x4xf32> to vector<8x4x4xf32>
      %59 = arith.mulf %52, %58 : vector<8x4x4xf32>
      %60 = vector.broadcast %49 : vector<8x1x4xf32> to vector<8x4x4xf32>
      %61 = arith.mulf %51, %60 : vector<8x4x4xf32>
      %62 = arith.addf %59, %61 : vector<8x4x4xf32>
      %63 = tpu.concatenate %57, %62 in 2 : vector<8x4x4xf32>, vector<8x4x4xf32> -> vector<8x4x8xf32>
      %64 = vector.shape_cast %63 : vector<8x4x8xf32> to vector<8x32xf32>
      %cst_29 = arith.constant 0.353553385 : f32
      %65 = vector.broadcast %cst_29 : f32 to vector<8x32xf32>
      %66 = arith.mulf %64, %65 : vector<8x32xf32>
      %67 = arith.truncf %66 : vector<8x32xf32> to vector<8x32xbf16>
      %68 = vector.shape_cast %42 : vector<8x16xf32> to vector<8x2x8xf32>
      %69 = vector.extract_strided_slice %68 {offsets = [0, 0, 0], sizes = [8, 2, 4], strides = [1, 1, 1]} : vector<8x2x8xf32> to vector<8x2x4xf32>
      %70 = vector.extract_strided_slice %68 {offsets = [0, 0, 4], sizes = [8, 2, 4], strides = [1, 1, 1]} : vector<8x2x8xf32> to vector<8x2x4xf32>
      %71 = vector.broadcast %46 : vector<8x1x4xf32> to vector<8x2x4xf32>
      %72 = arith.mulf %69, %71 : vector<8x2x4xf32>
      %73 = vector.broadcast %49 : vector<8x1x4xf32> to vector<8x2x4xf32>
      %74 = arith.mulf %70, %73 : vector<8x2x4xf32>
      %75 = arith.subf %72, %74 : vector<8x2x4xf32>
      %76 = vector.broadcast %46 : vector<8x1x4xf32> to vector<8x2x4xf32>
      %77 = arith.mulf %70, %76 : vector<8x2x4xf32>
      %78 = vector.broadcast %49 : vector<8x1x4xf32> to vector<8x2x4xf32>
      %79 = arith.mulf %69, %78 : vector<8x2x4xf32>
      %80 = arith.addf %77, %79 : vector<8x2x4xf32>
      %81 = tpu.concatenate %75, %80 in 2 : vector<8x2x4xf32>, vector<8x2x4xf32> -> vector<8x2x8xf32>
      %82 = vector.shape_cast %81 : vector<8x2x8xf32> to vector<8x16xf32>
      %83 = arith.truncf %82 : vector<8x16xf32> to vector<8x16xbf16>
      %84 = arith.truncf %43 : vector<8x16xf32> to vector<8x16xbf16>
      %85 = vector.extract_strided_slice %67 {offsets = [0, 0], sizes = [8, 8], strides = [1, 1]} : vector<8x32xbf16> to vector<8x8xbf16>
      %c0_30 = arith.constant 0 : index
      %c0_31 = arith.constant 0 : index
      %c0_32 = arith.constant 0 : index
      %c0_33 = arith.constant 0 : index
      %86 = vector.load %arg9[%c0_30, %c0_31, %c0_32, %c0_33] : memref<1x4x8x8xbf16, #tpu.memory_space<vmem>>, vector<1x1x8x8xbf16>
      %87 = vector.shape_cast %86 : vector<1x1x8x8xbf16> to vector<8x8xbf16>
      %88 = vector.shape_cast %85 : vector<8x8xbf16> to vector<1x1x8x8xbf16>
      tpu.vector_store %arg9[%c0_30, %c0_31, %c0_32, %c0_33], %88 {strides = array<i32>} : memref<1x4x8x8xbf16, #tpu.memory_space<vmem>>, vector<1x1x8x8xbf16>,
      %89 = vector.extract_strided_slice %67 {offsets = [0, 8], sizes = [8, 8], strides = [1, 1]} : vector<8x32xbf16> to vector<8x8xbf16>
      %c0_34 = arith.constant 0 : index
      %c1 = arith.constant 1 : index
      %c0_35 = arith.constant 0 : index
      %c0_36 = arith.constant 0 : index
      %90 = vector.load %arg9[%c0_34, %c1, %c0_35, %c0_36] : memref<1x4x8x8xbf16, #tpu.memory_space<vmem>>, vector<1x1x8x8xbf16>
      %91 = vector.shape_cast %90 : vector<1x1x8x8xbf16> to vector<8x8xbf16>
      %92 = vector.shape_cast %89 : vector<8x8xbf16> to vector<1x1x8x8xbf16>
      tpu.vector_store %arg9[%c0_34, %c1, %c0_35, %c0_36], %92 {strides = array<i32>} : memref<1x4x8x8xbf16, #tpu.memory_space<vmem>>, vector<1x1x8x8xbf16>,
      %93 = vector.extract_strided_slice %67 {offsets = [0, 16], sizes = [8, 8], strides = [1, 1]} : vector<8x32xbf16> to vector<8x8xbf16>
      %c0_37 = arith.constant 0 : index
      %c2 = arith.constant 2 : index
      %c0_38 = arith.constant 0 : index
      %c0_39 = arith.constant 0 : index
      %94 = vector.load %arg9[%c0_37, %c2, %c0_38, %c0_39] : memref<1x4x8x8xbf16, #tpu.memory_space<vmem>>, vector<1x1x8x8xbf16>
      %95 = vector.shape_cast %94 : vector<1x1x8x8xbf16> to vector<8x8xbf16>
      %96 = vector.shape_cast %93 : vector<8x8xbf16> to vector<1x1x8x8xbf16>
      tpu.vector_store %arg9[%c0_37, %c2, %c0_38, %c0_39], %96 {strides = array<i32>} : memref<1x4x8x8xbf16, #tpu.memory_space<vmem>>, vector<1x1x8x8xbf16>,
      %97 = vector.extract_strided_slice %67 {offsets = [0, 24], sizes = [8, 8], strides = [1, 1]} : vector<8x32xbf16> to vector<8x8xbf16>
      %c0_40 = arith.constant 0 : index
      %c3 = arith.constant 3 : index
      %c0_41 = arith.constant 0 : index
      %c0_42 = arith.constant 0 : index
      %98 = vector.load %arg9[%c0_40, %c3, %c0_41, %c0_42] : memref<1x4x8x8xbf16, #tpu.memory_space<vmem>>, vector<1x1x8x8xbf16>
      %99 = vector.shape_cast %98 : vector<1x1x8x8xbf16> to vector<8x8xbf16>
      %100 = vector.shape_cast %97 : vector<8x8xbf16> to vector<1x1x8x8xbf16>
      tpu.vector_store %arg9[%c0_40, %c3, %c0_41, %c0_42], %100 {strides = array<i32>} : memref<1x4x8x8xbf16, #tpu.memory_space<vmem>>, vector<1x1x8x8xbf16>,
      %101 = vector.extract_strided_slice %83 {offsets = [0, 0], sizes = [8, 8], strides = [1, 1]} : vector<8x16xbf16> to vector<8x8xbf16>
      %c0_43 = arith.constant 0 : index
      %c0_44 = arith.constant 0 : index
      %c0_45 = arith.constant 0 : index
      %c0_46 = arith.constant 0 : index
      %102 = vector.load %arg10[%c0_43, %c0_44, %c0_45, %c0_46] : memref<1x2x8x8xbf16, #tpu.memory_space<vmem>>, vector<1x1x8x8xbf16>
      %103 = vector.shape_cast %102 : vector<1x1x8x8xbf16> to vector<8x8xbf16>
      %104 = vector.shape_cast %101 : vector<8x8xbf16> to vector<1x1x8x8xbf16>
      tpu.vector_store %arg10[%c0_43, %c0_44, %c0_45, %c0_46], %104 {strides = array<i32>} : memref<1x2x8x8xbf16, #tpu.memory_space<vmem>>, vector<1x1x8x8xbf16>,
      %105 = vector.extract_strided_slice %84 {offsets = [0, 0], sizes = [8, 8], strides = [1, 1]} : vector<8x16xbf16> to vector<8x8xbf16>
      %c0_47 = arith.constant 0 : index
      %c0_48 = arith.constant 0 : index
      %c0_49 = arith.constant 0 : index
      %c0_50 = arith.constant 0 : index
      %106 = vector.load %arg11[%c0_47, %c0_48, %c0_49, %c0_50] : memref<1x2x8x8xbf16, #tpu.memory_space<vmem>>, vector<1x1x8x8xbf16>
      %107 = vector.shape_cast %106 : vector<1x1x8x8xbf16> to vector<8x8xbf16>
      %108 = vector.shape_cast %105 : vector<8x8xbf16> to vector<1x1x8x8xbf16>
      tpu.vector_store %arg11[%c0_47, %c0_48, %c0_49, %c0_50], %108 {strides = array<i32>} : memref<1x2x8x8xbf16, #tpu.memory_space<vmem>>, vector<1x1x8x8xbf16>,
      %109 = vector.extract_strided_slice %83 {offsets = [0, 8], sizes = [8, 8], strides = [1, 1]} : vector<8x16xbf16> to vector<8x8xbf16>
      %c0_51 = arith.constant 0 : index
      %c1_52 = arith.constant 1 : index
      %c0_53 = arith.constant 0 : index
      %c0_54 = arith.constant 0 : index
      %110 = vector.load %arg10[%c0_51, %c1_52, %c0_53, %c0_54] : memref<1x2x8x8xbf16, #tpu.memory_space<vmem>>, vector<1x1x8x8xbf16>
      %111 = vector.shape_cast %110 : vector<1x1x8x8xbf16> to vector<8x8xbf16>
      %112 = vector.shape_cast %109 : vector<8x8xbf16> to vector<1x1x8x8xbf16>
      tpu.vector_store %arg10[%c0_51, %c1_52, %c0_53, %c0_54], %112 {strides = array<i32>} : memref<1x2x8x8xbf16, #tpu.memory_space<vmem>>, vector<1x1x8x8xbf16>,
      %113 = vector.extract_strided_slice %84 {offsets = [0, 8], sizes = [8, 8], strides = [1, 1]} : vector<8x16xbf16> to vector<8x8xbf16>
      %c0_55 = arith.constant 0 : index
      %c1_56 = arith.constant 1 : index
      %c0_57 = arith.constant 0 : index
      %c0_58 = arith.constant 0 : index
      %114 = vector.load %arg11[%c0_55, %c1_56, %c0_57, %c0_58] : memref<1x2x8x8xbf16, #tpu.memory_space<vmem>>, vector<1x1x8x8xbf16>
      %115 = vector.shape_cast %114 : vector<1x1x8x8xbf16> to vector<8x8xbf16>
      %116 = vector.shape_cast %113 : vector<8x8xbf16> to vector<1x1x8x8xbf16>
      tpu.vector_store %arg11[%c0_55, %c1_56, %c0_57, %c0_58], %116 {strides = array<i32>} : memref<1x2x8x8xbf16, #tpu.memory_space<vmem>>, vector<1x1x8x8xbf16>,
    } else {
    }
    return
  }
  func.func @transform_0(%arg0: i32, %arg1: i32, %arg2: i32) -> (i32, i32, i32) {
    %c0_i32 = arith.constant 0 : i32
    return %arg0, %arg1, %arg2 : i32, i32, i32
  }
  func.func @transform_1(%arg0: i32, %arg1: i32, %arg2: i32) -> (i32, i32) {
    %c0_i32 = arith.constant 0 : i32
    %c0_i32_0 = arith.constant 0 : i32
    return %arg2, %c0_i32 : i32, i32
  }
  func.func @transform_2(%arg0: i32, %arg1: i32, %arg2: i32) -> (i32, i32) {
    %c0_i32 = arith.constant 0 : i32
    %c0_i32_0 = arith.constant 0 : i32
    %c0_i32_1 = arith.constant 0 : i32
    return %c0_i32, %c0_i32_0 : i32, i32
  }
  func.func @transform_3(%arg0: i32, %arg1: i32, %arg2: i32) -> (i32, i32) {
    %c0_i32 = arith.constant 0 : i32
    %c0_i32_0 = arith.constant 0 : i32
    %c0_i32_1 = arith.constant 0 : i32
    return %c0_i32, %c0_i32_0 : i32, i32
  }
  func.func @transform_4(%arg0: i32, %arg1: i32, %arg2: i32) -> (i32, i32, i32) {
    %c0_i32 = arith.constant 0 : i32
    %c0_i32_0 = arith.constant 0 : i32
    return %arg0, %arg1, %c0_i32 : i32, i32, i32
  }
  func.func @transform_5(%arg0: i32, %arg1: i32, %arg2: i32) -> (i32, i32, i32) {
    %c0_i32 = arith.constant 0 : i32
    %c0_i32_0 = arith.constant 0 : i32
    return %arg0, %arg1, %c0_i32 : i32, i32, i32
  }
  func.func @transform_6(%arg0: i32, %arg1: i32, %arg2: i32) -> (i32, i32, i32, i32) {
    %c0_i32 = arith.constant 0 : i32
    %c0_i32_0 = arith.constant 0 : i32
    %c0_i32_1 = arith.constant 0 : i32
    return %arg0, %c0_i32, %arg1, %c0_i32_0 : i32, i32, i32, i32
  }
  func.func @transform_7(%arg0: i32, %arg1: i32, %arg2: i32) -> (i32, i32, i32, i32) {
    %c0_i32 = arith.constant 0 : i32
    %c0_i32_0 = arith.constant 0 : i32
    %c0_i32_1 = arith.constant 0 : i32
    return %arg0, %c0_i32, %arg1, %c0_i32_0 : i32, i32, i32, i32
  }
  func.func @transform_8(%arg0: i32, %arg1: i32, %arg2: i32) -> (i32, i32, i32, i32) {
    %c0_i32 = arith.constant 0 : i32
    %c0_i32_0 = arith.constant 0 : i32
    %c0_i32_1 = arith.constant 0 : i32
    return %arg0, %c0_i32, %arg1, %c0_i32_0 : i32, i32, i32, i32
  }
}

</mosaic_0001>

<llo_original>
// kernel: tpu_custom_call.1
$region0: #{tpu_custom_call.1}
  #allocation0 [shape = 'u32[]', space=smem, size = 0x4, offset = 0x4, fixed_abs, tag = 'smem constant byte address 0x4 - core index']
  #allocation1 [shape = 'u32[144,128]{1,0:T(1,128)}', space=vmem, size = 0x12000, scoped, tag = 'internal scratch']
  #allocation2 [shape = 'f32[8,64]{1,0:T(8,128)}', space=vmem, size = 0x1000, scoped, tag = 'scratch operand']
  %s0 = inlined_call_operand.vmem [shape: f32[2,8,32], index: 0, kind: input, shape index: {}]
  %s1 = inlined_call_operand.vmem [shape: bf16[32,64], index: 1, kind: input, shape index: {}]
  %s2 = inlined_call_operand.vmem [shape: f32[1,32], index: 2, kind: input, shape index: {}]
  %s3 = inlined_call_operand.vmem [shape: f32[1,16], index: 3, kind: input, shape index: {}]
  %s4 = inlined_call_operand.vmem [shape: f32[2,8,4], index: 4, kind: input, shape index: {}]
  %s5 = inlined_call_operand.vmem [shape: f32[2,8,4], index: 5, kind: input, shape index: {}]
  %s6 = inlined_call_operand.hbm [shape: bf16[2,4,8,8], index: 6, kind: output, shape index: {0}]
  %s7 = inlined_call_operand.hbm [shape: bf16[2,2,8,8], index: 7, kind: output, shape index: {1}]
  %s8 = inlined_call_operand.hbm [shape: bf16[2,2,8,8], index: 8, kind: output, shape index: {2}]
  %9 = xla_tuple %s6, %s7, %s8
  %s10 = sld [smem:[#allocation0]]
  $region81: #{tpu_custom_call.1} parent=0
    _
  %s12 = ssub.s32 1, %s10
  %s13 = scalar_select 0, %s12, %s10
  $region1: #{tpu_custom_call.1} parent=0
    #allocation3 [shape = 'u8[16384]{0}', space=vmem, size = 0x4000, scoped, tag = 'output window, operand 0']
    #allocation4 [shape = 's32[2]{0}', space=sflag, size = 0x8, scoped, tag = 'scoped memory for tpu_custom_call.1']
    #allocation5 [shape = 'u8[8192]{0}', space=vmem, size = 0x2000, scoped, tag = 'output window, operand 1']
    #allocation6 [shape = 's32[2]{0}', space=sflag, size = 0x8, scoped, tag = 'scoped memory for tpu_custom_call.1']
    #allocation7 [shape = 'u8[8192]{0}', space=vmem, size = 0x2000, scoped, tag = 'output window, operand 2']
    %14 = vsyncpa [#allocation4], 0
    %s15 = scalar_lea.sflag [#allocation4], 1
    %16 = vsyncpa %s15, 0
    %17 = vsyncpa [#allocation6], 0
    %s18 = scalar_lea.sflag [#allocation6], 1
    %19 = vsyncpa %s18, 0
    loop: start=0, step=1, limit=4
    $region2: #{tpu_custom_call.1} parent=1 // loop_pre_header
      _
    $region3: #{tpu_custom_call.1} parent=1 // loop_header
      %s21 = sphi 0, %s25
      %p22 = scmp.ge.s32.totalorder %s21, 4
      %s28 = sphi 0, %s47
      %s29 = sphi 0, %s43
      %s30 = sphi 0, %s39
      %s31 = sphi 0, %s28
      %s32 = sphi 0, %s29
      %s33 = sphi 0, %s30
      %s34 = sphi 0, %s31
      %s35 = sphi 0, %s32
      %s36 = sphi 0, %s33
      %s54 = sphi 0, %s56
      %s57 = sphi 0, %s54
      %s58 = sphi 0, %s57
      %s74 = sphi 0, %s58
      %s80 = sphi 0, %s82
      %s83 = sphi 0, %s80
      %s84 = sphi 0, %s83
      %s100 = sphi 0, %s84
      %s104 = sphi 0, %s104
      %s106 = sphi 0, %s104
      %s107 = sphi 0, %s106
      %s121 = sphi 0, %s107
      %s125 = sphi 0, %s125
      %s127 = sphi 0, %s125
      %s128 = sphi 0, %s127
      %s142 = sphi 0, %s128
      %s150 = sphi 0, %s152
      %s153 = sphi 0, %s150
      %s154 = sphi 0, %s153
      %s170 = sphi 0, %s154
      %s178 = sphi 0, %s180
      %s181 = sphi 0, %s178
      %s182 = sphi 0, %s181
      %s198 = sphi 0, %s182
      %s206 = sphi 0, %s208
      %s209 = sphi 0, %s206
      %s210 = sphi 0, %s209
      %s226 = sphi 0, %s210
      %s234 = sphi 0, %s236
      %s237 = sphi 0, %s234
      %s238 = sphi 0, %s237
      %s254 = sphi 0, %s238
      %s262 = sphi 0, %s264
      %s265 = sphi 0, %s262
      %s266 = sphi 0, %s265
      %s282 = sphi 0, %s266
    $region4: #{tpu_custom_call.1} parent=1 // loop_header_branch
      %24 = sbr.rel (%p22) target = $region8
    $region5: #{tpu_custom_call.1} parent=1 // loop_body
      %s26 = ssub.s32 %s21, 1
      %s27 = ssub.s32 %s21, 2
      %s37 = sadd.s32 1, %s30
      %p38 = scmp.ge.s32.totalorder %s37, 1
      %s39 = scalar_select %p38, 0, %s37
      %s40 = sadd.s32 1, %s29
      %s41 = scalar_select %p38, %s40, %s29
      %p42 = scmp.ge.s32.totalorder %s41, 1
      %s43 = scalar_select %p42, 0, %s41
      %s44 = sadd.s32 1, %s28
      %s45 = scalar_select %p42, %s44, %s28
      %p46 = scmp.ge.s32.totalorder %s45, 2
      %s47 = scalar_select %p46, 0, %s45
      %s48 = ssub.s32 %s28, %s47
      %s49 = ssub.s32 %s29, %s43
      %s50 = sor.u32 %s48, %s49
      %s51 = ssub.s32 %s30, %s39
      %s52 = sor.u32 %s50, %s51
      %p53 = scmp.eq.s32.totalorder %s52, 0
      %s55 = sadd.s32 %s54, 1
      %s56 = scalar_select %p53, %s54, %s55
      %p59 = pneg %p53
      %p60 = scmp.eq.s32.totalorder %s21, 1
      %p61 = por %p59, %p60
      %p62 = scmp.ne.s32.totalorder %s54, %s57
      %p63 = scmp.eq.s32.totalorder %s21, 0
      %p64 = por %p62, %p63
      %p65 = scmp.ne.s32.totalorder %s54, %s57
      %p66 = scmp.eq.s32.totalorder %s26, 1
      %p67 = por %p65, %p66
      %p68 = scmp.ne.s32.totalorder %s57, %s58
      %p69 = scmp.eq.s32.totalorder %s26, 0
      %p70 = por %p68, %p69
      %p71 = scmp.ne.s32.totalorder %s57, %s58
      %p72 = scmp.eq.s32.totalorder %s27, 1
      %p73 = por %p71, %p72
      %p75 = scmp.ne.s32.totalorder %s58, %s74
      %p76 = scmp.eq.s32.totalorder %s27, 0
      %p77 = por %p75, %p76
      %s78 = ssub.s32 %s30, %s39
      %p79 = scmp.eq.s32.totalorder %s78, 0
      %s81 = sadd.s32 %s80, 1
      %s82 = scalar_select %p79, %s80, %s81
      %p85 = pneg %p79
      %p86 = scmp.eq.s32.totalorder %s21, 1
      %p87 = por %p85, %p86
      %p88 = scmp.ne.s32.totalorder %s80, %s83
      %p89 = scmp.eq.s32.totalorder %s21, 0
      %p90 = por %p88, %p89
      %p91 = scmp.ne.s32.totalorder %s80, %s83
      %p92 = scmp.eq.s32.totalorder %s26, 1
      %p93 = por %p91, %p92
      %p94 = scmp.ne.s32.totalorder %s83, %s84
      %p95 = scmp.eq.s32.totalorder %s26, 0
      %p96 = por %p94, %p95
      %p97 = scmp.ne.s32.totalorder %s83, %s84
      %p98 = scmp.eq.s32.totalorder %s27, 1
      %p99 = por %p97, %p98
      %p101 = scmp.ne.s32.totalorder %s84, %s100
      %p102 = scmp.eq.s32.totalorder %s27, 0
      %p103 = por %p101, %p102
      %s105 = sadd.s32 %s104, 1
      %p108 = scmp.eq.s32.totalorder %s21, 1
      %p109 = scmp.ne.s32.totalorder %s104, %s106
      %p110 = scmp.eq.s32.totalorder %s21, 0
      %p111 = por %p109, %p110
      %p112 = scmp.ne.s32.totalorder %s104, %s106
      %p113 = scmp.eq.s32.totalorder %s26, 1
      %p114 = por %p112, %p113
      %p115 = scmp.ne.s32.totalorder %s106, %s107
      %p116 = scmp.eq.s32.totalorder %s26, 0
      %p117 = por %p115, %p116
      %p118 = scmp.ne.s32.totalorder %s106, %s107
      %p119 = scmp.eq.s32.totalorder %s27, 1
      %p120 = por %p118, %p119
      %p122 = scmp.ne.s32.totalorder %s107, %s121
      %p123 = scmp.eq.s32.totalorder %s27, 0
      %p124 = por %p122, %p123
      %s126 = sadd.s32 %s125, 1
      %p129 = scmp.eq.s32.totalorder %s21, 1
      %p130 = scmp.ne.s32.totalorder %s125, %s127
      %p131 = scmp.eq.s32.totalorder %s21, 0
      %p132 = por %p130, %p131
      %p133 = scmp.ne.s32.totalorder %s125, %s127
      %p134 = scmp.eq.s32.totalorder %s26, 1
      %p135 = por %p133, %p134
      %p136 = scmp.ne.s32.totalorder %s127, %s128
      %p137 = scmp.eq.s32.totalorder %s26, 0
      %p138 = por %p136, %p137
      %p139 = scmp.ne.s32.totalorder %s127, %s128
      %p140 = scmp.eq.s32.totalorder %s27, 1
      %p141 = por %p139, %p140
      %p143 = scmp.ne.s32.totalorder %s128, %s142
      %p144 = scmp.eq.s32.totalorder %s27, 0
      %p145 = por %p143, %p144
      %s146 = ssub.s32 %s28, %s47
      %s147 = ssub.s32 %s29, %s43
      %s148 = sor.u32 %s146, %s147
      %p149 = scmp.eq.s32.totalorder %s148, 0
      %s151 = sadd.s32 %s150, 1
      %s152 = scalar_select %p149, %s150, %s151
      %p155 = pneg %p149
      %p156 = scmp.eq.s32.totalorder %s21, 1
      %p157 = por %p155, %p156
      %p158 = scmp.ne.s32.totalorder %s150, %s153
      %p159 = scmp.eq.s32.totalorder %s21, 0
      %p160 = por %p158, %p159
      %p161 = scmp.ne.s32.totalorder %s150, %s153
      %p162 = scmp.eq.s32.totalorder %s26, 1
      %p163 = por %p161, %p162
      %p164 = scmp.ne.s32.totalorder %s153, %s154
      %p165 = scmp.eq.s32.totalorder %s26, 0
      %p166 = por %p164, %p165
      %p167 = scmp.ne.s32.totalorder %s153, %s154
      %p168 = scmp.eq.s32.totalorder %s27, 1
      %p169 = por %p167, %p168
      %p171 = scmp.ne.s32.totalorder %s154, %s170
      %p172 = scmp.eq.s32.totalorder %s27, 0
      %p173 = por %p171, %p172
      %s174 = ssub.s32 %s28, %s47
      %s175 = ssub.s32 %s29, %s43
      %s176 = sor.u32 %s174, %s175
      %p177 = scmp.eq.s32.totalorder %s176, 0
      %s179 = sadd.s32 %s178, 1
      %s180 = scalar_select %p177, %s178, %s179
      %p183 = pneg %p177
      %p184 = scmp.eq.s32.totalorder %s21, 1
      %p185 = por %p183, %p184
      %p186 = scmp.ne.s32.totalorder %s178, %s181
      %p187 = scmp.eq.s32.totalorder %s21, 0
      %p188 = por %p186, %p187
      %p189 = scmp.ne.s32.totalorder %s178, %s181
      %p190 = scmp.eq.s32.totalorder %s26, 1
      %p191 = por %p189, %p190
      %p192 = scmp.ne.s32.totalorder %s181, %s182
      %p193 = scmp.eq.s32.totalorder %s26, 0
      %p194 = por %p192, %p193
      %p195 = scmp.ne.s32.totalorder %s181, %s182
      %p196 = scmp.eq.s32.totalorder %s27, 1
      %p197 = por %p195, %p196
      %p199 = scmp.ne.s32.totalorder %s182, %s198
      %p200 = scmp.eq.s32.totalorder %s27, 0
      %p201 = por %p199, %p200
      %s202 = ssub.s32 %s28, %s47
      %s203 = ssub.s32 %s29, %s43
      %s204 = sor.u32 %s202, %s203
      %p205 = scmp.eq.s32.totalorder %s204, 0
      %s207 = sadd.s32 %s206, 1
      %s208 = scalar_select %p205, %s206, %s207
      %p211 = pneg %p205
      %p212 = scmp.eq.s32.totalorder %s21, 1
      %p213 = por %p211, %p212
      %p214 = scmp.ne.s32.totalorder %s206, %s209
      %p215 = scmp.eq.s32.totalorder %s21, 0
      %p216 = por %p214, %p215
      %p217 = scmp.ne.s32.totalorder %s206, %s209
      %p218 = scmp.eq.s32.totalorder %s26, 1
      %p219 = por %p217, %p218
      %p220 = scmp.ne.s32.totalorder %s209, %s210
      %p221 = scmp.eq.s32.totalorder %s26, 0
      %p222 = por %p220, %p221
      %p223 = scmp.ne.s32.totalorder %s209, %s210
      %p224 = scmp.eq.s32.totalorder %s27, 1
      %p225 = por %p223, %p224
      %p227 = scmp.ne.s32.totalorder %s210, %s226
      %p228 = scmp.eq.s32.totalorder %s27, 0
      %p229 = por %p227, %p228
      %s230 = ssub.s32 %s28, %s47
      %s231 = ssub.s32 %s29, %s43
      %s232 = sor.u32 %s230, %s231
      %p233 = scmp.eq.s32.totalorder %s232, 0
      %s235 = sadd.s32 %s234, 1
      %s236 = scalar_select %p233, %s234, %s235
      %p239 = pneg %p233
      %p240 = scmp.eq.s32.totalorder %s21, 1
      %p241 = por %p239, %p240
      %p242 = scmp.ne.s32.totalorder %s234, %s237
      %p243 = scmp.eq.s32.totalorder %s21, 0
      %p244 = por %p242, %p243
      %p245 = scmp.ne.s32.totalorder %s234, %s237
      %p246 = scmp.eq.s32.totalorder %s26, 1
      %p247 = por %p245, %p246
      %p248 = scmp.ne.s32.totalorder %s237, %s238
      %p249 = scmp.eq.s32.totalorder %s26, 0
      %p250 = por %p248, %p249
      %p251 = scmp.ne.s32.totalorder %s237, %s238
      %p252 = scmp.eq.s32.totalorder %s27, 1
      %p253 = por %p251, %p252
      %p255 = scmp.ne.s32.totalorder %s238, %s254
      %p256 = scmp.eq.s32.totalorder %s27, 0
      %p257 = por %p255, %p256
      %s258 = ssub.s32 %s28, %s47
      %s259 = ssub.s32 %s29, %s43
      %s260 = sor.u32 %s258, %s259
      %p261 = scmp.eq.s32.totalorder %s260, 0
      %s263 = sadd.s32 %s262, 1
      %s264 = scalar_select %p261, %s262, %s263
      %p267 = pneg %p261
      %p268 = scmp.eq.s32.totalorder %s21, 1
      %p269 = por %p267, %p268
      %p270 = scmp.ne.s32.totalorder %s262, %s265
      %p271 = scmp.eq.s32.totalorder %s21, 0
      %p272 = por %p270, %p271
      %p273 = scmp.ne.s32.totalorder %s262, %s265
      %p274 = scmp.eq.s32.totalorder %s26, 1
      %p275 = por %p273, %p274
      %p276 = scmp.ne.s32.totalorder %s265, %s266
      %p277 = scmp.eq.s32.totalorder %s26, 0
      %p278 = por %p276, %p277
      %p279 = scmp.ne.s32.totalorder %s265, %s266
      %p280 = scmp.eq.s32.totalorder %s27, 1
      %p281 = por %p279, %p280
      %p283 = scmp.ne.s32.totalorder %s266, %s282
      %p284 = scmp.eq.s32.totalorder %s27, 0
      %p285 = por %p283, %p284
      %p286 = scmp.le.s32.totalorder 1, %s21
      %p287 = scmp.lt.s32.totalorder %s21, 3
      %p288 = pnand %p286, %p287
      %p289 = pneg %p288
      // Predicated region
      $region9: #{tpu_custom_call.1} parent=5 // pred_check
        _
      $region10: #{tpu_custom_call.1} parent=5 // pred_check_branch
        %291 = sbr.rel (%p288) target = $region12
      $region11: #{tpu_custom_call.1} parent=5 // pred_region
        %s292 = ssub.s32 %s21, 1
        // Predicated region
        $region13: #{tpu_custom_call.1} parent=11 // pred_check
          %p293 = pneg %p96
        $region14: #{tpu_custom_call.1} parent=11 // pred_check_branch
          %295 = sbr.rel (%p293) target = $region16
        $region15: #{tpu_custom_call.1} parent=11 // pred_region
          %s296 = smul.u32 4, %s33
          %p297 = scmp.lt.s32.totalorder %s296, 3
          %s298 = scalar_select %p297, %s296, 3
          %s299 = smul.addr %s298, 4
          %s300 = scalar_lea.vmem %s1, %s299
          %s301 = smul.u32 4, %s33
        $region16: #{tpu_custom_call.1} parent=11 // pred_fallthru
          _
        // Predicated region
        $region17: #{tpu_custom_call.1} parent=11 // pred_check
          %p302 = pneg %p117
        $region18: #{tpu_custom_call.1} parent=11 // pred_check_branch
          %304 = sbr.rel (%p302) target = $region20
        $region19: #{tpu_custom_call.1} parent=11 // pred_region
          _
        $region20: #{tpu_custom_call.1} parent=11 // pred_fallthru
          _
        // Predicated region
        $region21: #{tpu_custom_call.1} parent=11 // pred_check
          %p305 = pneg %p138
        $region22: #{tpu_custom_call.1} parent=11 // pred_check_branch
          %307 = sbr.rel (%p305) target = $region24
        $region23: #{tpu_custom_call.1} parent=11 // pred_region
          _
        $region24: #{tpu_custom_call.1} parent=11 // pred_fallthru
          _
      $region12: #{tpu_custom_call.1} parent=5 // pred_fallthru
        _
      %p308 = scmp.lt.s32.totalorder %s21, 2
      // Predicated region
      $region25: #{tpu_custom_call.1} parent=5 // pred_check
        %p309 = pneg %p308
      $region26: #{tpu_custom_call.1} parent=5 // pred_check_branch
        %311 = sbr.rel (%p309) target = $region28
      $region27: #{tpu_custom_call.1} parent=5 // pred_region
        // Predicated region
        $region29: #{tpu_custom_call.1} parent=27 // pred_check
          %p312 = pneg %p64
        $region30: #{tpu_custom_call.1} parent=27 // pred_check_branch
          %314 = sbr.rel (%p312) target = $region32
        $region31: #{tpu_custom_call.1} parent=27 // pred_region
          %p315 = scmp.lt.s32.totalorder %s28, 1
          %s316 = scalar_select %p315, %s28, 1
          %p317 = scmp.lt.s32.totalorder %s29, 0
          %s318 = scalar_select %p317, %s29, 0
          %p319 = scmp.lt.s32.totalorder %s30, 0
          %s320 = scalar_select %p319, %s30, 0
          %s321 = sadd.s32 %s320, %s318
          %s322 = sadd.s32 %s321, %s316
          %s323 = smul.addr %s322, 8
          %s324 = scalar_lea.vmem %s0, %s323
        $region32: #{tpu_custom_call.1} parent=27 // pred_fallthru
          _
        // Predicated region
        $region33: #{tpu_custom_call.1} parent=27 // pred_check
          %p325 = pneg %p160
        $region34: #{tpu_custom_call.1} parent=27 // pred_check_branch
          %327 = sbr.rel (%p325) target = $region36
        $region35: #{tpu_custom_call.1} parent=27 // pred_region
          %p328 = scmp.lt.s32.totalorder %s28, 1
          %s329 = scalar_select %p328, %s28, 1
          %p330 = scmp.lt.s32.totalorder %s29, 0
          %s331 = scalar_select %p330, %s29, 0
          %s332 = sadd.s32 %s331, %s329
          %s333 = smul.addr %s332, 8
          %s334 = scalar_lea.vmem %s4, %s333
        $region36: #{tpu_custom_call.1} parent=27 // pred_fallthru
          _
        // Predicated region
        $region37: #{tpu_custom_call.1} parent=27 // pred_check
          %p335 = pneg %p188
        $region38: #{tpu_custom_call.1} parent=27 // pred_check_branch
          %337 = sbr.rel (%p335) target = $region40
        $region39: #{tpu_custom_call.1} parent=27 // pred_region
          %p338 = scmp.lt.s32.totalorder %s28, 1
          %s339 = scalar_select %p338, %s28, 1
          %p340 = scmp.lt.s32.totalorder %s29, 0
          %s341 = scalar_select %p340, %s29, 0
          %s342 = sadd.s32 %s341, %s339
          %s343 = smul.addr %s342, 8
          %s344 = scalar_lea.vmem %s5, %s343
        $region40: #{tpu_custom_call.1} parent=27 // pred_fallthru
          _
      $region28: #{tpu_custom_call.1} parent=5 // pred_fallthru
        _
      %p345 = scmp.le.s32.totalorder 1, %s21
      %p346 = scmp.lt.s32.totalorder %s21, 3
      %p347 = pnand %p345, %p346
      %p348 = pneg %p347
      // Predicated region
      $region41: #{tpu_custom_call.1} parent=5 // pred_check
        _
      $region42: #{tpu_custom_call.1} parent=5 // pred_check_branch
        %350 = sbr.rel (%p347) target = $region44
      $region43: #{tpu_custom_call.1} parent=5 // pred_region
        %s351 = ssub.s32 %s21, 1
        %p352 = scmp.lt.s32.totalorder %s31, 1
        %s353 = scalar_select %p352, %s31, 1
        %p354 = scmp.lt.s32.totalorder %s32, 0
        %s355 = scalar_select %p354, %s32, 0
        %p356 = scmp.lt.s32.totalorder %s33, 0
        %s357 = scalar_select %p356, %s33, 0
        %s358 = sadd.s32 %s357, %s355
        %s359 = sadd.s32 %s358, %s353
        %s360 = smul.addr %s359, 8
        %s361 = scalar_lea.vmem %s0, %s360
        %p362 = pneg %p70
        %p363 = pneg %p67
        %s364 = smul.u32 4, %s33
        %p365 = scmp.lt.s32.totalorder %s364, 3
        %s366 = scalar_select %p365, %s364, 3
        %s367 = smul.addr %s366, 4
        %s368 = scalar_lea.vmem %s1, %s367
        %p369 = pneg %p96
        %p370 = pneg %p93
        %p371 = pneg %p117
        %p372 = pneg %p114
        %p373 = pneg %p138
        %p374 = pneg %p135
        %p375 = scmp.lt.s32.totalorder %s31, 1
        %s376 = scalar_select %p375, %s31, 1
        %p377 = scmp.lt.s32.totalorder %s32, 0
        %s378 = scalar_select %p377, %s32, 0
        %s379 = sadd.s32 %s378, %s376
        %s380 = smul.addr %s379, 8
        %s381 = scalar_lea.vmem %s4, %s380
        %p382 = pneg %p166
        %p383 = pneg %p163
        %p384 = scmp.lt.s32.totalorder %s31, 1
        %s385 = scalar_select %p384, %s31, 1
        %p386 = scmp.lt.s32.totalorder %s32, 0
        %s387 = scalar_select %p386, %s32, 0
        %s388 = sadd.s32 %s387, %s385
        %s389 = smul.addr %s388, 8
        %s390 = scalar_lea.vmem %s5, %s389
        %p391 = pneg %p194
        %p392 = pneg %p191
        %p393 = pneg %p222
        %p394 = pneg %p219
        %s395 = sand.u32 %s209, 1
        %s396 = scalar_lea.sflag [#allocation4], %s395
        %s397 = sand.u32 %s209, 1
        %s398 = smul.addr %s397, 16
        %s399 = scalar_lea.vmem [#allocation3], %s398
        %p400 = pneg %p250
        %p401 = pneg %p247
        %s402 = sand.u32 %s26, 1
        %s403 = scalar_lea.sflag [#allocation6], %s402
        %s404 = sand.u32 %s237, 1
        %s405 = smul.addr %s404, 8
        %s406 = scalar_lea.vmem [#allocation5], %s405
        %p407 = pneg %p278
        %p408 = pneg %p275
        %s409 = sand.u32 %s26, 1
        %s410 = scalar_lea.sflag [#allocation6], %s409
        %s411 = sand.u32 %s265, 1
        %s412 = smul.addr %s411, 8
        %s413 = scalar_lea.vmem [#allocation7], %s412
        %p414 = scmp.lt.s32.totalorder %s31, 1
        %s415 = scalar_select %p414, %s31, 1
        %p416 = scmp.lt.s32.totalorder %s32, 0
        %s417 = scalar_select %p416, %s32, 0
        %p418 = scmp.lt.s32.totalorder %s33, 0
        %s419 = scalar_select %p418, %s33, 0
        %s420 = sadd.s32 %s419, %s417
        %s421 = sadd.s32 %s420, %s415
        %s422 = smul.addr %s421, 8
        %s423 = scalar_lea.vmem %s0, %s422
        %s424 = smul.u32 4, %s33
        %p425 = scmp.lt.s32.totalorder %s424, 3
        %s426 = scalar_select %p425, %s424, 3
        %s427 = smul.addr %s426, 4
        %s428 = scalar_lea.vmem %s1, %s427
        %s429 = smul.u32 4, %s33
        %p430 = scmp.lt.s32.totalorder %s31, 1
        %s431 = scalar_select %p430, %s31, 1
        %p432 = scmp.lt.s32.totalorder %s32, 0
        %s433 = scalar_select %p432, %s32, 0
        %s434 = sadd.s32 %s433, %s431
        %s435 = smul.addr %s434, 8
        %s436 = scalar_lea.vmem %s4, %s435
        %p437 = scmp.lt.s32.totalorder %s31, 1
        %s438 = scalar_select %p437, %s31, 1
        %p439 = scmp.lt.s32.totalorder %s32, 0
        %s440 = scalar_select %p439, %s32, 0
        %s441 = sadd.s32 %s440, %s438
        %s442 = smul.addr %s441, 8
        %s443 = scalar_lea.vmem %s5, %s442
        %p445 = scmp.eq.s32.totalorder %s33, 0
        // Predicated region
        $region45: #{tpu_custom_call.1} parent=43 // pred_check
          %p446 = pneg %p445
        $region46: #{tpu_custom_call.1} parent=43 // pred_check_branch
          %448 = sbr.rel (%p446) target = $region48
        $region47: #{tpu_custom_call.1} parent=43 // pred_region
          %vm449 = vcmask 523264
          %450 = vst.msk [vmem:[#allocation2] sm:$0xff] %vm449, 0.0
        $region48: #{tpu_custom_call.1} parent=43 // pred_fallthru
          _
        %v451 = vld [vmem:[#allocation2] sm:$0xff]
        %v452 = vld [vmem:[%s423] sm:$0xff]
        %v453 = vpack.c.bf16 %v452, %v452
        %v454 = vld [vmem:[%s428] sm:$0xf]
        %v455 = vld [vmem:[%s428 + $0x4] sm:$0xf]
        %v456 = vld [vmem:[%s428 + $0x8] sm:$0xf]
        %v457 = vld [vmem:[%s428 + $0xc] sm:$0xf]
        %v462 = vunpack.c.l.b16 %v454
        %v463 = vunpack.c.l.b16 %v455
        %v464 = vunpack.c.l.b16 %v456
        %v465 = vunpack.c.l.b16 %v457
        %v466 = vpack.c.b16 %v463, %v462
        %v467 = vpack.c.b16 %v465, %v464
        %vm470 = vcmask 261120
        %v472 = vsel %vm470, %v453, 0
        %474 = vmatprep.subr.bf16.mxu0 0
        %475 = vmatpush1.bf16.msra.mxu0 %v466
        %476 = vmatprep.subr.bf16.mxu0 0
        %477 = vmatpush1.bf16.msra.mxu0 %v467
        %478 = vmatprep.subr.bf16.mxu0 0
        %479 = vmatpush1.bf16.msra.mxu0 0
        %480 = vmatprep.subr.bf16.mxu0 0
        %481 = vmatpush1.bf16.msra.mxu0 0
        %482 = vmatprep.subr.bf16.mxu0 0
        %483 = vmatpush1.bf16.msra.mxu0 0
        %484 = vmatprep.subr.bf16.mxu0 0
        %485 = vmatpush1.bf16.msra.mxu0 0
        %486 = vmatprep.subr.bf16.mxu0 0
        %487 = vmatpush1.bf16.msra.mxu0 0
        %488 = vmatprep.subr.bf16.mxu0 0
        %489 = vmatpush1.bf16.msra.mxu0 0
        %490 = vmatprep.subr.bf16.mxu0 0
        %491 = vmatpush1.bf16.msra.mxu0 0
        %492 = vmatprep.subr.bf16.mxu0 0
        %493 = vmatpush1.bf16.msra.mxu0 0
        %494 = vmatprep.subr.bf16.mxu0 0
        %495 = vmatpush1.bf16.msra.mxu0 0
        %496 = vmatprep.subr.bf16.mxu0 0
        %497 = vmatpush1.bf16.msra.mxu0 0
        %498 = vmatprep.subr.bf16.mxu0 0
        %499 = vmatpush1.bf16.msra.mxu0 0
        %500 = vmatprep.subr.bf16.mxu0 0
        %501 = vmatpush1.bf16.msra.mxu0 0
        %502 = vmatprep.subr.bf16.mxu0 0
        %503 = vmatpush1.bf16.msra.mxu0 0
        %504 = vmatprep.subr.bf16.mxu0 0
        %505 = vmatpush1.bf16.msra.mxu0 0
        %506 = vmatprep.mubr.bf16.mxu0 0
        %507 = vmatmul.mubr.bf16.gmra.mrb[0].mxu0 %v472
        %v508 = vpop.f32.mrb[0].mxu0
        %v509 = vadd.f32 0.0, %v508
        %v510 = vpop.f32.mrb[0].mxu0
        %v511 = vpop.f32.mrb[0].mxu0
        %v512 = vpop.f32.mrb[0].mxu0
        %513 = vdwg.mxu0
        %v514 = vadd.f32 %v451, %v509
        %vm515 = vcmask 523264
        %516 = vst.msk [vmem:[#allocation2] sm:$0xff] %vm515, %v514
        // Predicated region
        $region49: #{tpu_custom_call.1} parent=43 // pred_check
          %p517 = pneg %p445
        $region50: #{tpu_custom_call.1} parent=43 // pred_check_branch
          %519 = sbr.rel (%p517) target = $region52
        $region51: #{tpu_custom_call.1} parent=43 // pred_region
          %v520 = vld [vmem:[#allocation2] sm:$0xff]
          %v521 = vld [vmem:[%s2] sm:$0x1]
          %v522 = vmul.f32 %v520, %v520
          %v523 = vsel %vm470, %v522, 0.0
          %524 = vadd.xlane.f32.xlu0 %v523
          %v525 = vpop.xlane.xlu0 %524
          %v526 = vrcp.pop 32.0
          %v527 = vmul.f32 %v525, %v526
          %v528 = vadd.f32 %v527, 1e-06
          %v529 = vrsqrt.pop %v528
          %v530 = vmul.f32 %v520, %v529
          %v532 = vlaneseq
          %v533 = vshrl.u32 %v532, 7
          %v534 = vsub.s32 0, %v533
          %v535 = vrot.slane %v521, %v534
          %v537 = vmul.f32 %v530, %v535
          %v538 = vld [vmem:[%s3] sm:$0x1]
          %540 = vrot.lane.b32.xlu0 %v522, 96
          %v541 = vpop.permute.xlu0 %540
          %vm543 = vcmask 130048
          %v544 = vsel %vm543, %v541, 0.0
          %545 = vadd.xlane.f32.xlu0 %v544
          %v546 = vpop.xlane.xlu0 %545
          %v547 = vrcp.pop 16.0
          %v548 = vmul.f32 %v546, %v547
          %v549 = vadd.f32 %v548, 1e-06
          %v550 = vrsqrt.pop %v549
          %v551 = vmul.f32 %v520, %v550
          %v553 = vlaneseq
          %v554 = vshrl.u32 %v553, 7
          %v555 = vsub.s32 0, %v554
          %v556 = vrot.slane %v538, %v555
          %557 = vrot.lane.b32.xlu0 %v556, 32
          %v558 = vpop.permute.xlu0 %557
          %v560 = vmul.f32 %v551, %v558
          %v561 = vld [vmem:[%s436] sm:$0xff]
          %v563 = vcombine.high %v561, %v561
          %v565 = vunpack.c.l.s4 1966171168
          %v566 = vunpack.c.0.s8 %v565
          %v567 = vlaneseq
          %v568 = vshrl.u32 %v567, 7
          %v569 = vsub.s32 %v566, %v568
          %v570 = vrot.slane %v561, %v569
          %v572 = vunpack.c.l.s4 1966171168
          %v573 = vunpack.c.0.s8 %v572
          %v574 = vlaneseq
          %v575 = vshrl.u32 %v574, 7
          %v576 = vsub.s32 %v573, %v575
          %v577 = vrot.slane %v563, %v576
          %v578 = vcombine.high %v570, %v570
          %v579 = vcombine.high %v577, %v577
          %v581 = vunpack.c.l.s4 1966171168
          %v582 = vunpack.c.0.s8 %v581
          %v583 = vlaneseq
          %v584 = vshrl.u32 %v583, 7
          %v585 = vsub.s32 %v582, %v584
          %v586 = vrot.slane %v570, %v585
          %v588 = vunpack.c.l.s4 1966171168
          %v589 = vunpack.c.0.s8 %v588
          %v590 = vlaneseq
          %v591 = vshrl.u32 %v590, 7
          %v592 = vsub.s32 %v589, %v591
          %v593 = vrot.slane %v577, %v592
          %v595 = vunpack.c.l.s4 1966171168
          %v596 = vunpack.c.0.s8 %v595
          %v597 = vlaneseq
          %v598 = vshrl.u32 %v597, 7
          %v599 = vsub.s32 %v596, %v598
          %v600 = vrot.slane %v578, %v599
          %v602 = vunpack.c.l.s4 1966171168
          %v603 = vunpack.c.0.s8 %v602
          %v604 = vlaneseq
          %v605 = vshrl.u32 %v604, 7
          %v606 = vsub.s32 %v603, %v605
          %v607 = vrot.slane %v579, %v606
          %v608 = vcombine.high %v586, %v586
          %v609 = vcombine.high %v593, %v593
          %v610 = vcombine.high %v600, %v600
          %v611 = vcombine.high %v607, %v607
          %v612 = vld [vmem:[%s443] sm:$0xff]
          %v614 = vcombine.high %v612, %v612
          %v616 = vunpack.c.l.s4 1966171168
          %v617 = vunpack.c.0.s8 %v616
          %v618 = vlaneseq
          %v619 = vshrl.u32 %v618, 7
          %v620 = vsub.s32 %v617, %v619
          %v621 = vrot.slane %v612, %v620
          %v623 = vunpack.c.l.s4 1966171168
          %v624 = vunpack.c.0.s8 %v623
          %v625 = vlaneseq
          %v626 = vshrl.u32 %v625, 7
          %v627 = vsub.s32 %v624, %v626
          %v628 = vrot.slane %v614, %v627
          %v629 = vcombine.high %v621, %v621
          %v630 = vcombine.high %v628, %v628
          %v632 = vunpack.c.l.s4 1966171168
          %v633 = vunpack.c.0.s8 %v632
          %v634 = vlaneseq
          %v635 = vshrl.u32 %v634, 7
          %v636 = vsub.s32 %v633, %v635
          %v637 = vrot.slane %v621, %v636
          %v639 = vunpack.c.l.s4 1966171168
          %v640 = vunpack.c.0.s8 %v639
          %v641 = vlaneseq
          %v642 = vshrl.u32 %v641, 7
          %v643 = vsub.s32 %v640, %v642
          %v644 = vrot.slane %v628, %v643
          %v646 = vunpack.c.l.s4 1966171168
          %v647 = vunpack.c.0.s8 %v646
          %v648 = vlaneseq
          %v649 = vshrl.u32 %v648, 7
          %v650 = vsub.s32 %v647, %v649
          %v651 = vrot.slane %v629, %v650
          %v653 = vunpack.c.l.s4 1966171168
          %v654 = vunpack.c.0.s8 %v653
          %v655 = vlaneseq
          %v656 = vshrl.u32 %v655, 7
          %v657 = vsub.s32 %v654, %v656
          %v658 = vrot.slane %v630, %v657
          %v659 = vcombine.high %v637, %v637
          %v660 = vcombine.high %v644, %v644
          %v661 = vcombine.high %v651, %v651
          %v662 = vcombine.high %v658, %v658
          %664 = vrot.lane.b32.xlu0 %v537, 120
          %v665 = vpop.permute.xlu0 %664
          %667 = vrot.lane.b32.xlu0 %v537, 112
          %v668 = vpop.permute.xlu0 %667
          %670 = vrot.lane.b32.xlu0 %v537, 104
          %v671 = vpop.permute.xlu0 %670
          %v673 = vcombine.low %v537, %v668
          %v674 = vcombine.high %v537, %v668
          %v676 = vunpack.c.l.s4 1983009808
          %v677 = vunpack.c.0.s8 %v676
          %v678 = vlaneseq
          %v679 = vshrl.u32 %v678, 7
          %v680 = vsub.s32 %v677, %v679
          %v681 = vrot.slane %v673, %v680
          %v683 = vunpack.c.l.s4 1983009808
          %v684 = vunpack.c.0.s8 %v683
          %v685 = vlaneseq
          %v686 = vshrl.u32 %v685, 7
          %v687 = vsub.s32 %v684, %v686
          %v688 = vrot.slane %v674, %v687
          %v689 = vcombine.low %v665, %v671
          %v690 = vcombine.high %v665, %v671
          %v692 = vunpack.c.l.s4 1983009808
          %v693 = vunpack.c.0.s8 %v692
          %v694 = vlaneseq
          %v695 = vshrl.u32 %v694, 7
          %v696 = vsub.s32 %v693, %v695
          %v697 = vrot.slane %v689, %v696
          %v699 = vunpack.c.l.s4 1983009808
          %v700 = vunpack.c.0.s8 %v699
          %v701 = vlaneseq
          %v702 = vshrl.u32 %v701, 7
          %v703 = vsub.s32 %v700, %v702
          %v704 = vrot.slane %v690, %v703
          %v705 = vcombine.low %v681, %v697
          %v706 = vcombine.high %v681, %v697
          %v708 = vunpack.c.l.s4 1934713408
          %v709 = vunpack.c.0.s8 %v708
          %v710 = vlaneseq
          %v711 = vshrl.u32 %v710, 7
          %v712 = vsub.s32 %v709, %v711
          %v713 = vrot.slane %v705, %v712
          %v715 = vunpack.c.l.s4 1934713408
          %v716 = vunpack.c.0.s8 %v715
          %v717 = vlaneseq
          %v718 = vshrl.u32 %v717, 7
          %v719 = vsub.s32 %v716, %v718
          %v720 = vrot.slane %v706, %v719
          %v721 = vcombine.low %v688, %v704
          %v722 = vcombine.high %v688, %v704
          %v724 = vunpack.c.l.s4 1934713408
          %v725 = vunpack.c.0.s8 %v724
          %v726 = vlaneseq
          %v727 = vshrl.u32 %v726, 7
          %v728 = vsub.s32 %v725, %v727
          %v729 = vrot.slane %v721, %v728
          %v731 = vunpack.c.l.s4 1934713408
          %v732 = vunpack.c.0.s8 %v731
          %v733 = vlaneseq
          %v734 = vshrl.u32 %v733, 7
          %v735 = vsub.s32 %v732, %v734
          %v736 = vrot.slane %v722, %v735
          %v737 = vcombine.high %v713, 0.0
          %v738 = vcombine.high %v720, 0.0
          %v739 = vcombine.high %v729, 0.0
          %v740 = vcombine.high %v736, 0.0
          %v741 = vlaneseq
          %v742 = vshrl.u32 %v741, 7
          %v743 = vsub.s32 0, %v742
          %v744 = vrot.slane %v586, %v743
          %v745 = vlaneseq
          %v746 = vshrl.u32 %v745, 7
          %v747 = vsub.s32 0, %v746
          %v748 = vrot.slane %v600, %v747
          %v749 = vlaneseq
          %v750 = vshrl.u32 %v749, 7
          %v751 = vsub.s32 0, %v750
          %v752 = vrot.slane %v608, %v751
          %v753 = vlaneseq
          %v754 = vshrl.u32 %v753, 7
          %v755 = vsub.s32 0, %v754
          %v756 = vrot.slane %v610, %v755
          %v757 = vlaneseq
          %v758 = vshrl.u32 %v757, 7
          %v759 = vsub.s32 0, %v758
          %v760 = vrot.slane %v593, %v759
          %v761 = vlaneseq
          %v762 = vshrl.u32 %v761, 7
          %v763 = vsub.s32 0, %v762
          %v764 = vrot.slane %v607, %v763
          %v765 = vlaneseq
          %v766 = vshrl.u32 %v765, 7
          %v767 = vsub.s32 0, %v766
          %v768 = vrot.slane %v609, %v767
          %v769 = vlaneseq
          %v770 = vshrl.u32 %v769, 7
          %v771 = vsub.s32 0, %v770
          %v772 = vrot.slane %v611, %v771
          %v781 = vmul.f32 %v713, %v744
          %v782 = vmul.f32 %v737, %v748
          %v783 = vmul.f32 %v720, %v752
          %v784 = vmul.f32 %v738, %v756
          %v785 = vmul.f32 %v729, %v760
          %v786 = vmul.f32 %v739, %v764
          %v787 = vmul.f32 %v736, %v768
          %v788 = vmul.f32 %v740, %v772
          %v789 = vlaneseq
          %v790 = vshrl.u32 %v789, 7
          %v791 = vsub.s32 0, %v790
          %v792 = vrot.slane %v637, %v791
          %v793 = vlaneseq
          %v794 = vshrl.u32 %v793, 7
          %v795 = vsub.s32 0, %v794
          %v796 = vrot.slane %v651, %v795
          %v797 = vlaneseq
          %v798 = vshrl.u32 %v797, 7
          %v799 = vsub.s32 0, %v798
          %v800 = vrot.slane %v659, %v799
          %v801 = vlaneseq
          %v802 = vshrl.u32 %v801, 7
          %v803 = vsub.s32 0, %v802
          %v804 = vrot.slane %v661, %v803
          %v805 = vlaneseq
          %v806 = vshrl.u32 %v805, 7
          %v807 = vsub.s32 0, %v806
          %v808 = vrot.slane %v644, %v807
          %v809 = vlaneseq
          %v810 = vshrl.u32 %v809, 7
          %v811 = vsub.s32 0, %v810
          %v812 = vrot.slane %v658, %v811
          %v813 = vlaneseq
          %v814 = vshrl.u32 %v813, 7
          %v815 = vsub.s32 0, %v814
          %v816 = vrot.slane %v660, %v815
          %v817 = vlaneseq
          %v818 = vshrl.u32 %v817, 7
          %v819 = vsub.s32 0, %v818
          %v820 = vrot.slane %v662, %v819
          %829 = vrot.lane.b32.xlu0 %v792, 4
          %v830 = vpop.permute.xlu0 %829
          %831 = vrot.lane.b32.xlu0 %v796, 4
          %v832 = vpop.permute.xlu0 %831
          %833 = vrot.lane.b32.xlu0 %v800, 4
          %v834 = vpop.permute.xlu0 %833
          %835 = vrot.lane.b32.xlu0 %v804, 4
          %v836 = vpop.permute.xlu0 %835
          %837 = vrot.lane.b32.xlu0 %v808, 4
          %v838 = vpop.permute.xlu0 %837
          %839 = vrot.lane.b32.xlu0 %v812, 4
          %v840 = vpop.permute.xlu0 %839
          %841 = vrot.lane.b32.xlu0 %v816, 4
          %v842 = vpop.permute.xlu0 %841
          %843 = vrot.lane.b32.xlu0 %v820, 4
          %v844 = vpop.permute.xlu0 %843
          %v853 = vmul.f32 %v713, %v830
          %v854 = vmul.f32 %v737, %v832
          %v855 = vmul.f32 %v720, %v834
          %v856 = vmul.f32 %v738, %v836
          %v857 = vmul.f32 %v729, %v838
          %v858 = vmul.f32 %v739, %v840
          %v859 = vmul.f32 %v736, %v842
          %v860 = vmul.f32 %v740, %v844
          %869 = vrot.lane.b32.xlu0 %v853, 124
          %v870 = vpop.permute.xlu0 %869
          %871 = vrot.lane.b32.xlu0 %v854, 124
          %v872 = vpop.permute.xlu0 %871
          %873 = vrot.lane.b32.xlu0 %v855, 124
          %v874 = vpop.permute.xlu0 %873
          %875 = vrot.lane.b32.xlu0 %v856, 124
          %v876 = vpop.permute.xlu0 %875
          %877 = vrot.lane.b32.xlu0 %v857, 124
          %v878 = vpop.permute.xlu0 %877
          %879 = vrot.lane.b32.xlu0 %v858, 124
          %v880 = vpop.permute.xlu0 %879
          %881 = vrot.lane.b32.xlu0 %v859, 124
          %v882 = vpop.permute.xlu0 %881
          %883 = vrot.lane.b32.xlu0 %v860, 124
          %v884 = vpop.permute.xlu0 %883
          %v893 = vsub.f32 %v781, %v870
          %v894 = vsub.f32 %v782, %v872
          %v895 = vsub.f32 %v783, %v874
          %v896 = vsub.f32 %v784, %v876
          %v897 = vsub.f32 %v785, %v878
          %v898 = vsub.f32 %v786, %v880
          %v899 = vsub.f32 %v787, %v882
          %v900 = vsub.f32 %v788, %v884
          %901 = vrot.lane.b32.xlu0 %v744, 4
          %v902 = vpop.permute.xlu0 %901
          %903 = vrot.lane.b32.xlu0 %v748, 4
          %v904 = vpop.permute.xlu0 %903
          %905 = vrot.lane.b32.xlu0 %v752, 4
          %v906 = vpop.permute.xlu0 %905
          %907 = vrot.lane.b32.xlu0 %v756, 4
          %v908 = vpop.permute.xlu0 %907
          %909 = vrot.lane.b32.xlu0 %v760, 4
          %v910 = vpop.permute.xlu0 %909
          %911 = vrot.lane.b32.xlu0 %v764, 4
          %v912 = vpop.permute.xlu0 %911
          %913 = vrot.lane.b32.xlu0 %v768, 4
          %v914 = vpop.permute.xlu0 %913
          %915 = vrot.lane.b32.xlu0 %v772, 4
          %v916 = vpop.permute.xlu0 %915
          %v925 = vmul.f32 %v713, %v902
          %v926 = vmul.f32 %v737, %v904
          %v927 = vmul.f32 %v720, %v906
          %v928 = vmul.f32 %v738, %v908
          %v929 = vmul.f32 %v729, %v910
          %v930 = vmul.f32 %v739, %v912
          %v931 = vmul.f32 %v736, %v914
          %v932 = vmul.f32 %v740, %v916
          %v933 = vmul.f32 %v713, %v792
          %v934 = vmul.f32 %v737, %v796
          %v935 = vmul.f32 %v720, %v800
          %v936 = vmul.f32 %v738, %v804
          %v937 = vmul.f32 %v729, %v808
          %v938 = vmul.f32 %v739, %v812
          %v939 = vmul.f32 %v736, %v816
          %v940 = vmul.f32 %v740, %v820
          %949 = vrot.lane.b32.xlu0 %v933, 4
          %v950 = vpop.permute.xlu0 %949
          %951 = vrot.lane.b32.xlu0 %v934, 4
          %v952 = vpop.permute.xlu0 %951
          %953 = vrot.lane.b32.xlu0 %v935, 4
          %v954 = vpop.permute.xlu0 %953
          %955 = vrot.lane.b32.xlu0 %v936, 4
          %v956 = vpop.permute.xlu0 %955
          %957 = vrot.lane.b32.xlu0 %v937, 4
          %v958 = vpop.permute.xlu0 %957
          %959 = vrot.lane.b32.xlu0 %v938, 4
          %v960 = vpop.permute.xlu0 %959
          %961 = vrot.lane.b32.xlu0 %v939, 4
          %v962 = vpop.permute.xlu0 %961
          %963 = vrot.lane.b32.xlu0 %v940, 4
          %v964 = vpop.permute.xlu0 %963
          %v973 = vadd.f32 %v925, %v950
          %v974 = vadd.f32 %v926, %v952
          %v975 = vadd.f32 %v927, %v954
          %v976 = vadd.f32 %v928, %v956
          %v977 = vadd.f32 %v929, %v958
          %v978 = vadd.f32 %v930, %v960
          %v979 = vadd.f32 %v931, %v962
          %v980 = vadd.f32 %v932, %v964
          %vm981 = vcmask 31744
          %v982 = vsel %vm981, %v893, %v973
          %v983 = vsel %vm981, %v894, %v974
          %v984 = vsel %vm981, %v895, %v975
          %v985 = vsel %vm981, %v896, %v976
          %v986 = vsel %vm981, %v897, %v977
          %v987 = vsel %vm981, %v898, %v978
          %v988 = vsel %vm981, %v899, %v979
          %v989 = vsel %vm981, %v900, %v980
          %v990 = vcombine.low %v982, %v984
          %v992 = vunpack.c.l.s4 1983009808
          %v993 = vunpack.c.0.s8 %v992
          %v994 = vlaneseq
          %v995 = vshrl.u32 %v994, 7
          %v996 = vsub.s32 %v993, %v995
          %v997 = vrot.slane %v990, %v996
          %v998 = vcombine.low %v983, %v985
          %v1000 = vunpack.c.l.s4 1983009808
          %v1001 = vunpack.c.0.s8 %v1000
          %v1002 = vlaneseq
          %v1003 = vshrl.u32 %v1002, 7
          %v1004 = vsub.s32 %v1001, %v1003
          %v1005 = vrot.slane %v998, %v1004
          %v1006 = vcombine.low %v986, %v988
          %v1008 = vunpack.c.l.s4 1983009808
          %v1009 = vunpack.c.0.s8 %v1008
          %v1010 = vlaneseq
          %v1011 = vshrl.u32 %v1010, 7
          %v1012 = vsub.s32 %v1009, %v1011
          %v1013 = vrot.slane %v1006, %v1012
          %v1014 = vcombine.low %v987, %v989
          %v1016 = vunpack.c.l.s4 1983009808
          %v1017 = vunpack.c.0.s8 %v1016
          %v1018 = vlaneseq
          %v1019 = vshrl.u32 %v1018, 7
          %v1020 = vsub.s32 %v1017, %v1019
          %v1021 = vrot.slane %v1014, %v1020
          %v1022 = vcombine.low %v997, %v1005
          %v1023 = vcombine.high %v997, %v1005
          %v1025 = vunpack.c.l.s4 1934713408
          %v1026 = vunpack.c.0.s8 %v1025
          %v1027 = vlaneseq
          %v1028 = vshrl.u32 %v1027, 7
          %v1029 = vsub.s32 %v1026, %v1028
          %v1030 = vrot.slane %v1022, %v1029
          %v1032 = vunpack.c.l.s4 1934713408
          %v1033 = vunpack.c.0.s8 %v1032
          %v1034 = vlaneseq
          %v1035 = vshrl.u32 %v1034, 7
          %v1036 = vsub.s32 %v1033, %v1035
          %v1037 = vrot.slane %v1023, %v1036
          %v1038 = vcombine.low %v1013, %v1021
          %v1039 = vcombine.high %v1013, %v1021
          %v1041 = vunpack.c.l.s4 1934713408
          %v1042 = vunpack.c.0.s8 %v1041
          %v1043 = vlaneseq
          %v1044 = vshrl.u32 %v1043, 7
          %v1045 = vsub.s32 %v1042, %v1044
          %v1046 = vrot.slane %v1038, %v1045
          %v1048 = vunpack.c.l.s4 1934713408
          %v1049 = vunpack.c.0.s8 %v1048
          %v1050 = vlaneseq
          %v1051 = vshrl.u32 %v1050, 7
          %v1052 = vsub.s32 %v1049, %v1051
          %v1053 = vrot.slane %v1039, %v1052
          %v1054 = vcombine.low %v1030, %v1046
          %v1055 = vcombine.high %v1030, %v1046
          %v1056 = vcombine.low %v1037, %v1053
          %v1057 = vcombine.high %v1037, %v1053
          %1059 = vrot.lane.b32.xlu0 %v1055, 8
          %v1060 = vpop.permute.xlu0 %1059
          %1063 = vrot.lane.b32.xlu0 %v1056, 16
          %v1064 = vpop.permute.xlu0 %1063
          %1067 = vrot.lane.b32.xlu0 %v1057, 24
          %v1068 = vpop.permute.xlu0 %1067
          %vm1070 = vcmask 64512
          %v1071 = vsel %vm1070, %v1054, %v1060
          %v1072 = vsel %vm543, %v1071, %v1064
          %vm1073 = vcmask 195584
          %v1074 = vsel %vm1073, %v1072, %v1068
          %v1075 = vmul.f32 %v1074, 0.35355338
          %v1076 = vpack.c.bf16 %v1075, %v1075
          %1078 = vrot.lane.b32.xlu0 %v560, 120
          %v1079 = vpop.permute.xlu0 %1078
          %1080 = vrot.lane.b32.xlu0 %v560, 96
          %v1081 = vpop.permute.xlu0 %1080
          %1082 = vrot.lane.b32.xlu0 %v1079, 96
          %v1083 = vpop.permute.xlu0 %1082
          %v1086 = vcombine.high %v1081, 0.0
          %v1088 = vunpack.c.l.s4 1983009808
          %v1089 = vunpack.c.0.s8 %v1088
          %v1090 = vlaneseq
          %v1091 = vshrl.u32 %v1090, 7
          %v1092 = vsub.s32 %v1089, %v1091
          %v1093 = vrot.slane %v1081, %v1092
          %v1095 = vunpack.c.l.s4 1983009808
          %v1096 = vunpack.c.0.s8 %v1095
          %v1097 = vlaneseq
          %v1098 = vshrl.u32 %v1097, 7
          %v1099 = vsub.s32 %v1096, %v1098
          %v1100 = vrot.slane %v1086, %v1099
          %v1101 = vcombine.high %v1083, 0.0
          %v1103 = vunpack.c.l.s4 1983009808
          %v1104 = vunpack.c.0.s8 %v1103
          %v1105 = vlaneseq
          %v1106 = vshrl.u32 %v1105, 7
          %v1107 = vsub.s32 %v1104, %v1106
          %v1108 = vrot.slane %v1083, %v1107
          %v1110 = vunpack.c.l.s4 1983009808
          %v1111 = vunpack.c.0.s8 %v1110
          %v1112 = vlaneseq
          %v1113 = vshrl.u32 %v1112, 7
          %v1114 = vsub.s32 %v1111, %v1113
          %v1115 = vrot.slane %v1101, %v1114
          %v1116 = vcombine.low %v1093, %v1108
          %v1117 = vcombine.high %v1093, %v1108
          %v1119 = vunpack.c.l.s4 1934713408
          %v1120 = vunpack.c.0.s8 %v1119
          %v1121 = vlaneseq
          %v1122 = vshrl.u32 %v1121, 7
          %v1123 = vsub.s32 %v1120, %v1122
          %v1124 = vrot.slane %v1116, %v1123
          %v1126 = vunpack.c.l.s4 1934713408
          %v1127 = vunpack.c.0.s8 %v1126
          %v1128 = vlaneseq
          %v1129 = vshrl.u32 %v1128, 7
          %v1130 = vsub.s32 %v1127, %v1129
          %v1131 = vrot.slane %v1117, %v1130
          %v1132 = vcombine.low %v1100, %v1115
          %v1133 = vcombine.high %v1100, %v1115
          %v1135 = vunpack.c.l.s4 1934713408
          %v1136 = vunpack.c.0.s8 %v1135
          %v1137 = vlaneseq
          %v1138 = vshrl.u32 %v1137, 7
          %v1139 = vsub.s32 %v1136, %v1138
          %v1140 = vrot.slane %v1132, %v1139
          %v1142 = vunpack.c.l.s4 1934713408
          %v1143 = vunpack.c.0.s8 %v1142
          %v1144 = vlaneseq
          %v1145 = vshrl.u32 %v1144, 7
          %v1146 = vsub.s32 %v1143, %v1145
          %v1147 = vrot.slane %v1133, %v1146
          %v1148 = vcombine.high %v1124, 0.0
          %v1149 = vcombine.high %v1131, 0.0
          %v1150 = vcombine.high %v1140, 0.0
          %v1151 = vcombine.high %v1147, 0.0
          %v1152 = vmul.f32 %v1124, %v744
          %v1153 = vmul.f32 %v1148, %v748
          %v1154 = vmul.f32 %v1131, %v752
          %v1155 = vmul.f32 %v1149, %v756
          %v1156 = vmul.f32 %v1140, %v760
          %v1157 = vmul.f32 %v1150, %v764
          %v1158 = vmul.f32 %v1147, %v768
          %v1159 = vmul.f32 %v1151, %v772
          %v1160 = vmul.f32 %v1124, %v830
          %v1161 = vmul.f32 %v1148, %v832
          %v1162 = vmul.f32 %v1131, %v834
          %v1163 = vmul.f32 %v1149, %v836
          %v1164 = vmul.f32 %v1140, %v838
          %v1165 = vmul.f32 %v1150, %v840
          %v1166 = vmul.f32 %v1147, %v842
          %v1167 = vmul.f32 %v1151, %v844
          %1176 = vrot.lane.b32.xlu0 %v1160, 124
          %v1177 = vpop.permute.xlu0 %1176
          %1178 = vrot.lane.b32.xlu0 %v1161, 124
          %v1179 = vpop.permute.xlu0 %1178
          %1180 = vrot.lane.b32.xlu0 %v1162, 124
          %v1181 = vpop.permute.xlu0 %1180
          %1182 = vrot.lane.b32.xlu0 %v1163, 124
          %v1183 = vpop.permute.xlu0 %1182
          %1184 = vrot.lane.b32.xlu0 %v1164, 124
          %v1185 = vpop.permute.xlu0 %1184
          %1186 = vrot.lane.b32.xlu0 %v1165, 124
          %v1187 = vpop.permute.xlu0 %1186
          %1188 = vrot.lane.b32.xlu0 %v1166, 124
          %v1189 = vpop.permute.xlu0 %1188
          %1190 = vrot.lane.b32.xlu0 %v1167, 124
          %v1191 = vpop.permute.xlu0 %1190
          %v1200 = vsub.f32 %v1152, %v1177
          %v1201 = vsub.f32 %v1153, %v1179
          %v1202 = vsub.f32 %v1154, %v1181
          %v1203 = vsub.f32 %v1155, %v1183
          %v1204 = vsub.f32 %v1156, %v1185
          %v1205 = vsub.f32 %v1157, %v1187
          %v1206 = vsub.f32 %v1158, %v1189
          %v1207 = vsub.f32 %v1159, %v1191
          %v1208 = vmul.f32 %v1124, %v902
          %v1209 = vmul.f32 %v1148, %v904
          %v1210 = vmul.f32 %v1131, %v906
          %v1211 = vmul.f32 %v1149, %v908
          %v1212 = vmul.f32 %v1140, %v910
          %v1213 = vmul.f32 %v1150, %v912
          %v1214 = vmul.f32 %v1147, %v914
          %v1215 = vmul.f32 %v1151, %v916
          %v1216 = vmul.f32 %v1124, %v792
          %v1217 = vmul.f32 %v1148, %v796
          %v1218 = vmul.f32 %v1131, %v800
          %v1219 = vmul.f32 %v1149, %v804
          %v1220 = vmul.f32 %v1140, %v808
          %v1221 = vmul.f32 %v1150, %v812
          %v1222 = vmul.f32 %v1147, %v816
          %v1223 = vmul.f32 %v1151, %v820
          %1232 = vrot.lane.b32.xlu0 %v1216, 4
          %v1233 = vpop.permute.xlu0 %1232
          %1234 = vrot.lane.b32.xlu0 %v1217, 4
          %v1235 = vpop.permute.xlu0 %1234
          %1236 = vrot.lane.b32.xlu0 %v1218, 4
          %v1237 = vpop.permute.xlu0 %1236
          %1238 = vrot.lane.b32.xlu0 %v1219, 4
          %v1239 = vpop.permute.xlu0 %1238
          %1240 = vrot.lane.b32.xlu0 %v1220, 4
          %v1241 = vpop.permute.xlu0 %1240
          %1242 = vrot.lane.b32.xlu0 %v1221, 4
          %v1243 = vpop.permute.xlu0 %1242
          %1244 = vrot.lane.b32.xlu0 %v1222, 4
          %v1245 = vpop.permute.xlu0 %1244
          %1246 = vrot.lane.b32.xlu0 %v1223, 4
          %v1247 = vpop.permute.xlu0 %1246
          %v1256 = vadd.f32 %v1208, %v1233
          %v1257 = vadd.f32 %v1209, %v1235
          %v1258 = vadd.f32 %v1210, %v1237
          %v1259 = vadd.f32 %v1211, %v1239
          %v1260 = vadd.f32 %v1212, %v1241
          %v1261 = vadd.f32 %v1213, %v1243
          %v1262 = vadd.f32 %v1214, %v1245
          %v1263 = vadd.f32 %v1215, %v1247
          %v1264 = vsel %vm981, %v1200, %v1256
          %v1265 = vsel %vm981, %v1201, %v1257
          %v1266 = vsel %vm981, %v1202, %v1258
          %v1267 = vsel %vm981, %v1203, %v1259
          %v1268 = vsel %vm981, %v1204, %v1260
          %v1269 = vsel %vm981, %v1205, %v1261
          %v1270 = vsel %vm981, %v1206, %v1262
          %v1271 = vsel %vm981, %v1207, %v1263
          %v1272 = vcombine.low %v1264, %v1266
          %v1274 = vunpack.c.l.s4 1983009808
          %v1275 = vunpack.c.0.s8 %v1274
          %v1276 = vlaneseq
          %v1277 = vshrl.u32 %v1276, 7
          %v1278 = vsub.s32 %v1275, %v1277
          %v1279 = vrot.slane %v1272, %v1278
          %v1280 = vcombine.low %v1265, %v1267
          %v1282 = vunpack.c.l.s4 1983009808
          %v1283 = vunpack.c.0.s8 %v1282
          %v1284 = vlaneseq
          %v1285 = vshrl.u32 %v1284, 7
          %v1286 = vsub.s32 %v1283, %v1285
          %v1287 = vrot.slane %v1280, %v1286
          %v1288 = vcombine.low %v1268, %v1270
          %v1290 = vunpack.c.l.s4 1983009808
          %v1291 = vunpack.c.0.s8 %v1290
          %v1292 = vlaneseq
          %v1293 = vshrl.u32 %v1292, 7
          %v1294 = vsub.s32 %v1291, %v1293
          %v1295 = vrot.slane %v1288, %v1294
          %v1296 = vcombine.low %v1269, %v1271
          %v1298 = vunpack.c.l.s4 1983009808
          %v1299 = vunpack.c.0.s8 %v1298
          %v1300 = vlaneseq
          %v1301 = vshrl.u32 %v1300, 7
          %v1302 = vsub.s32 %v1299, %v1301
          %v1303 = vrot.slane %v1296, %v1302
          %v1304 = vcombine.low %v1279, %v1287
          %v1306 = vunpack.c.l.s4 1934713408
          %v1307 = vunpack.c.0.s8 %v1306
          %v1308 = vlaneseq
          %v1309 = vshrl.u32 %v1308, 7
          %v1310 = vsub.s32 %v1307, %v1309
          %v1311 = vrot.slane %v1304, %v1310
          %v1312 = vcombine.low %v1295, %v1303
          %v1314 = vunpack.c.l.s4 1934713408
          %v1315 = vunpack.c.0.s8 %v1314
          %v1316 = vlaneseq
          %v1317 = vshrl.u32 %v1316, 7
          %v1318 = vsub.s32 %v1315, %v1317
          %v1319 = vrot.slane %v1312, %v1318
          %v1320 = vcombine.low %v1311, %v1319
          %v1321 = vcombine.high %v1311, %v1319
          %1323 = vrot.lane.b32.xlu0 %v1321, 8
          %v1324 = vpop.permute.xlu0 %1323
          %v1326 = vsel %vm1070, %v1320, %v1324
          %v1327 = vpack.c.bf16 %v1326, %v1326
          %v1328 = vpack.c.bf16 %v520, %v520
          %vm1329 = vcmask 60416
          %1330 = vst.msk [vmem:[%s399] sm:$0xf] %vm1329, %v1076
          %v1332 = vunpack.c.l.b16 %v1076
          %v1333 = vpack.c.b16 %v1332, %v1332
          %1334 = vrot.lane.b32.xlu0 %v1333, 120
          %v1335 = vpop.permute.xlu0 %1334
          %s1337 = scalar_lea.vmem %s399, 4 [#allocation3]
          %1338 = vst.msk [vmem:[%s1337] sm:$0xf] %vm1329, %v1335
          %1339 = vrot.lane.b32.xlu0 %v1333, 112
          %v1340 = vpop.permute.xlu0 %1339
          %s1342 = scalar_lea.vmem %s399, 8 [#allocation3]
          %1343 = vst.msk [vmem:[%s1342] sm:$0xf] %vm1329, %v1340
          %1344 = vrot.lane.b32.xlu0 %v1333, 104
          %v1345 = vpop.permute.xlu0 %1344
          %s1347 = scalar_lea.vmem %s399, 12 [#allocation3]
          %1348 = vst.msk [vmem:[%s1347] sm:$0xf] %vm1329, %v1345
          %1349 = vst.msk [vmem:[%s406] sm:$0xf] %vm1329, %v1327
          %v1351 = vunpack.c.l.b16 %v1328
          %v1352 = vpack.c.b16 %v1351, %v1351
          %1353 = vrot.lane.b32.xlu0 %v1352, 80
          %v1354 = vpop.permute.xlu0 %1353
          %1356 = vst.msk [vmem:[%s413] sm:$0xf] %vm1329, %v1354
          %v1358 = vunpack.c.l.b16 %v1327
          %v1359 = vpack.c.b16 %v1358, %v1358
          %1360 = vrot.lane.b32.xlu0 %v1359, 120
          %v1361 = vpop.permute.xlu0 %1360
          %s1363 = scalar_lea.vmem %s406, 4 [#allocation5]
          %1364 = vst.msk [vmem:[%s1363] sm:$0xf] %vm1329, %v1361
          %1365 = vrot.lane.b32.xlu0 %v1352, 72
          %v1366 = vpop.permute.xlu0 %1365
          %s1368 = scalar_lea.vmem %s413, 4 [#allocation7]
          %1369 = vst.msk [vmem:[%s1368] sm:$0xf] %vm1329, %v1366
        $region52: #{tpu_custom_call.1} parent=43 // pred_fallthru
          _
        %s1370 = sand.u32 %s209, 1
        %s1371 = scalar_lea.sflag [#allocation4], %s1370
        %s1372 = sand.u32 %s209, 1
        %s1373 = smul.addr %s1372, 16
        %s1374 = scalar_lea.vmem [#allocation3], %s1373
        %s1375 = sand.u32 %s26, 1
        %s1376 = scalar_lea.sflag [#allocation6], %s1375
        %s1377 = sand.u32 %s237, 1
        %s1378 = smul.addr %s1377, 8
        %s1379 = scalar_lea.vmem [#allocation5], %s1378
        %s1380 = sand.u32 %s26, 1
        %s1381 = scalar_lea.sflag [#allocation6], %s1380
        %s1382 = sand.u32 %s265, 1
        %s1383 = smul.addr %s1382, 8
        %s1384 = scalar_lea.vmem [#allocation7], %s1383
        // Predicated region
        $region53: #{tpu_custom_call.1} parent=43 // pred_check
          %p1385 = pneg %p219
        $region54: #{tpu_custom_call.1} parent=43 // pred_check_branch
          %1387 = sbr.rel (%p1385) target = $region56
        $region55: #{tpu_custom_call.1} parent=43 // pred_region
          %s1389 = ssub.s32 256, 256
          %1390 = vsyncadd %s1371, %s1389
          %s1391 = smul.addr %s31, 4
          %s1392 = sadd.s32 %s32, %s1391
          %s1393 = smul.addr %s1392, 64
          %s1394 = scalar_lea.hbm %s6, %s1393
          %s1395 = sshll.u32 %s1374, 4
          %s1396 = int_to_ptr.vmem [resolvable:$true] %s1395
          %1401 = dma.vmem_to_hbm [thread:$0]  %s1396, 256, %s1394, %s1371, 64, 64, 4
        $region56: #{tpu_custom_call.1} parent=43 // pred_fallthru
          _
        // Predicated region
        $region57: #{tpu_custom_call.1} parent=43 // pred_check
          %p1402 = pneg %p247
        $region58: #{tpu_custom_call.1} parent=43 // pred_check_branch
          %1404 = sbr.rel (%p1402) target = $region60
        $region59: #{tpu_custom_call.1} parent=43 // pred_region
          %s1406 = ssub.s32 128, 128
          %1407 = vsyncadd %s1376, %s1406
          %s1408 = smul.addr %s31, 2
          %s1409 = sadd.s32 %s32, %s1408
          %s1410 = smul.addr %s1409, 64
          %s1411 = scalar_lea.hbm %s7, %s1410
          %s1412 = sshll.u32 %s1379, 4
          %s1413 = int_to_ptr.vmem [resolvable:$true] %s1412
          %1418 = dma.vmem_to_hbm [thread:$0]  %s1413, 128, %s1411, %s1376, 64, 64, 4
        $region60: #{tpu_custom_call.1} parent=43 // pred_fallthru
          _
        // Predicated region
        $region61: #{tpu_custom_call.1} parent=43 // pred_check
          %p1419 = pneg %p275
        $region62: #{tpu_custom_call.1} parent=43 // pred_check_branch
          %1421 = sbr.rel (%p1419) target = $region64
        $region63: #{tpu_custom_call.1} parent=43 // pred_region
          %s1423 = ssub.s32 128, 128
          %1424 = vsyncadd %s1381, %s1423
          %s1425 = smul.addr %s31, 2
          %s1426 = sadd.s32 %s32, %s1425
          %s1427 = smul.addr %s1426, 64
          %s1428 = scalar_lea.hbm %s8, %s1427
          %s1429 = sshll.u32 %s1384, 4
          %s1430 = int_to_ptr.vmem [resolvable:$true] %s1429
          %1435 = dma.vmem_to_hbm [thread:$0]  %s1430, 128, %s1428, %s1381, 64, 64, 4
        $region64: #{tpu_custom_call.1} parent=43 // pred_fallthru
          _
      $region44: #{tpu_custom_call.1} parent=5 // pred_fallthru
        _
      %p1436 = scmp.le.s32.totalorder 2, %s21
      // Predicated region
      $region65: #{tpu_custom_call.1} parent=5 // pred_check
        %p1437 = pneg %p1436
      $region66: #{tpu_custom_call.1} parent=5 // pred_check_branch
        %1439 = sbr.rel (%p1437) target = $region68
      $region67: #{tpu_custom_call.1} parent=5 // pred_region
        %s1440 = ssub.s32 %s21, 2
        // Predicated region
        $region69: #{tpu_custom_call.1} parent=67 // pred_check
          %p1441 = pneg %p225
        $region70: #{tpu_custom_call.1} parent=67 // pred_check_branch
          %1443 = sbr.rel (%p1441) target = $region72
        $region71: #{tpu_custom_call.1} parent=67 // pred_region
          %s1444 = sand.u32 %s210, 1
          %s1445 = scalar_lea.sflag [#allocation4], %s1444
          %s1446 = sand.u32 %s210, 1
          %s1447 = smul.addr %s1446, 16
          %s1448 = scalar_lea.vmem [#allocation3], %s1447
          %1449 = dma.done %s1445, 256
        $region72: #{tpu_custom_call.1} parent=67 // pred_fallthru
          _
        // Predicated region
        $region73: #{tpu_custom_call.1} parent=67 // pred_check
          %p1450 = pneg %p253
        $region74: #{tpu_custom_call.1} parent=67 // pred_check_branch
          %1452 = sbr.rel (%p1450) target = $region76
        $region75: #{tpu_custom_call.1} parent=67 // pred_region
          %s1453 = sand.u32 %s27, 1
          %s1454 = scalar_lea.sflag [#allocation6], %s1453
          %s1455 = sand.u32 %s238, 1
          %s1456 = smul.addr %s1455, 8
          %s1457 = scalar_lea.vmem [#allocation5], %s1456
          %1458 = dma.done %s1454, 128
        $region76: #{tpu_custom_call.1} parent=67 // pred_fallthru
          _
        // Predicated region
        $region77: #{tpu_custom_call.1} parent=67 // pred_check
          %p1459 = pneg %p281
        $region78: #{tpu_custom_call.1} parent=67 // pred_check_branch
          %1461 = sbr.rel (%p1459) target = $region80
        $region79: #{tpu_custom_call.1} parent=67 // pred_region
          %s1462 = sand.u32 %s27, 1
          %s1463 = scalar_lea.sflag [#allocation6], %s1462
          %s1464 = sand.u32 %s266, 1
          %s1465 = smul.addr %s1464, 8
          %s1466 = scalar_lea.vmem [#allocation7], %s1465
          %1467 = dma.done %s1463, 128
        $region80: #{tpu_custom_call.1} parent=67 // pred_fallthru
          _
      $region68: #{tpu_custom_call.1} parent=5 // pred_fallthru
        _
    $region6: #{tpu_custom_call.1} parent=1 // loop_footer
      %s25 = sadd.s32 1, %s21
    $region7: #{tpu_custom_call.1} parent=1 // loop_footer_branch
      %20 = sbr.rel target = $region3
    $region8: #{tpu_custom_call.1} parent=1 // loop_exit
      _
    %1468 = vsyncpa [#allocation4], 1
    %s1469 = scalar_lea.sflag [#allocation4], 1
    %1470 = vsyncpa %s1469, 1
    %1471 = vsyncpa [#allocation6], 1
    %s1472 = scalar_lea.sflag [#allocation6], 1
    %1473 = vsyncpa %s1472, 1

</llo_original>
